<compile_context>
chip_gen: v6e
topology: v6e:2x2x1
jax: 0.10.0
libtpu: 0.0.40
codegen_flags: <defaults>
</compile_context>

<pallas_src>
import numpy as np
import jax
import jax.numpy as jnp
from jax import lax
from jax.experimental import pallas as pl
from jax.experimental.pallas import tpu as pltpu

# ---------------- configuration (small, consistent with the module) ----------------
B = 2
EMBED = 16        # embed_dim (== v_dim; required by the residual inside the attention)
HIDDEN = 32       # hidden_dim of the feed-forward
Q_DIM = 32
V_DIM = 16
HEADS = 4
H = W = 8
N = H * W         # 64 spatial positions per sample
BN = B * N        # 128 lanes: batch folded into the lane axis
KSIZE = 1         # kernel_size=1 -> every Conv2d is a pointwise (1x1) conv
ABS_MAX = 32.0 / (KSIZE * KSIZE)
EPS = 1e-5
DQH = Q_DIM // HEADS   # 8
DVH = V_DIM // HEADS   # 4

assert EMBED == V_DIM
assert BN == 128
assert HEADS > 1 and KSIZE == 1  # TODO(synk): kernel_size>1 / single-head branches not implemented

# ---- packed-slab row offsets -------------------------------------------------------
# wmat16 (144, 16): every weight whose contraction dim is 16 (embed or v_dim)
_WM_QKVB, _WM_WU, _WM_W1, WMAT_ROWS = 0, 96, 112, 144
# w2h (32, 32): FF down-projection weight + transposed same-head mask
_W2_ROW, _HMASK_ROW = 0, 16
# cvec (224, 1): all per-channel bias-like vectors (broadcast across lanes)
_CV_BQKVB, _CV_BU, _CV_DWC_W, _CV_DWC_B = 0, 96, 112, 128
_CV_BLN_G, _CV_BLN_B, _CV_B1, _CV_B2, CVEC_ROWS = 144, 160, 176, 208, 224
# rowp (96, 128): lane-shaped params/constants (LN affines, pool-weight rows, batch masks),
# each single-row constant placed at an 8-sublane-aligned offset.
_RP_LN1W, _RP_LN1B, _RP_LN2W, _RP_LN2B = 0, 16, 32, 48
_RP_WP0, _RP_WP1, _RP_M0, _RP_M1, ROWP_ROWS = 64, 72, 80, 88, 96


# ------------------------------ in-kernel helpers ------------------------------
def _erf(x):
    # Abramowitz & Stegun 7.1.26 (|err| < 1.5e-7).  Kept instead of lax.erf so the kernel
    # only uses ops guaranteed to lower in Mosaic; the exp runs on the EUP slot.
    a1, a2, a3, a4, a5 = 0.254829592, -0.284496736, 1.421413741, -1.453152027, 1.061405429
    p = 0.3275911
    s = jnp.where(x >= 0.0, 1.0, -1.0)
    ax = jnp.abs(x)
    t = 1.0 / (1.0 + p * ax)
    poly = ((((a5 * t + a4) * t + a3) * t + a2) * t + a1) * t
    return s * (1.0 - poly * jnp.exp(-ax * ax))


def _gelu(x):
    return 0.5 * x * (1.0 + _erf(x * 0.7071067811865476))


# ------------------------------ the fused kernel ------------------------------
def fused_block_kernel(x_ref, wm_ref, w2h_ref, rowp_ref, cvec_ref, o_ref):
    inv_cnt = 1.0 / float(EMBED * N)   # LayerNorm((C,H,W)) element count per sample
    inv_n = 1.0 / float(N)

    # (1,128) batch-column masks (constant rows of the rowp slab)
    m0 = rowp_ref[_RP_M0:_RP_M0 + 1, :]
    m1 = rowp_ref[_RP_M1:_RP_M1 + 1, :]

    def per_sample_norm(t):
        # LayerNorm over (C, H, W) per sample, computed lane-dense on a (C, B*N) tile:
        # single-pass sum / sum-of-squares; per-sample totals via the batch masks.
        r1 = jnp.sum(t, axis=0, keepdims=True)            # (1, 128)
        r2 = jnp.sum(t * t, axis=0, keepdims=True)        # (1, 128)
        s1_0 = jnp.sum(r1 * m0, axis=1, keepdims=True)    # (1, 1)
        s1_1 = jnp.sum(r1 * m1, axis=1, keepdims=True)
        s2_0 = jnp.sum(r2 * m0, axis=1, keepdims=True)
        s2_1 = jnp.sum(r2 * m1, axis=1, keepdims=True)
        mu = (s1_0 * m0 + s1_1 * m1) * inv_cnt            # (1, 128) per-column values
        ex2 = (s2_0 * m0 + s2_1 * m1) * inv_cnt
        var = ex2 - mu * mu
        return (t - mu) * lax.rsqrt(var + EPS)

    x = x_ref[...]                                         # (16, 128)

    # ---- LayerNorm1 (affine) ----
    x_ln = (per_sample_norm(x) * rowp_ref[_RP_LN1W:_RP_LN1W + EMBED, :]
            + rowp_ref[_RP_LN1B:_RP_LN1B + EMBED, :])

    # ---- merged Q/K/V/bias-net 1x1-conv projection: (96,16) @ (16,128) ----
    proj = (jnp.dot(wm_ref[_WM_QKVB:_WM_QKVB + 2 * Q_DIM + 2 * V_DIM, :], x_ln,
                    preferred_element_type=jnp.float32)
            + cvec_ref[_CV_BQKVB:_CV_BQKVB + 2 * Q_DIM + 2 * V_DIM, :])

    rq2 = jnp.square(jnp.maximum(proj[0:Q_DIM, :], 0.0))                    # relu(Q)^2
    rk2 = jnp.square(jnp.maximum(proj[Q_DIM:2 * Q_DIM, :], 0.0))            # relu(K)^2
    v = proj[2 * Q_DIM:2 * Q_DIM + V_DIM, :]                               # (16, 128)
    bp = proj[2 * Q_DIM + V_DIM:2 * Q_DIM + 2 * V_DIM, :]                  # bias-net conv

    # ---- phi normalisation: global (batch+head) norms, exactly like torch.norm ----
    def fsum(t):
        return jnp.sum(jnp.sum(t, axis=1, keepdims=True), axis=0, keepdims=True)
    sq1, sq2 = fsum(rq2), fsum(rq2 * rq2)
    sk1, sk2 = fsum(rk2), fsum(rk2 * rk2)
    phi_q = (jnp.sqrt(sq1) * lax.rsqrt(sq2)) * rq2    # ||relu(Q)|| / ||relu(Q)^2|| * relu(Q)^2
    phi_k = (jnp.sqrt(sk1) * lax.rsqrt(sk2)) * rk2

    # ---- per-sample KV in (V_DIM, Q_DIM) orientation (canonical MXU) ----
    # KV[cv, cq] = sum_n wpool[n] * V[cv, n] * phi_K[cq, n] within sample b; the
    # per-sample restriction rides in the pre-masked pool-weight rows wp0/wp1.
    hmask_t = w2h_ref[_HMASK_ROW:_HMASK_ROW + V_DIM, :]   # (16, 32) same-head mask

    def kv_for(wp_row):
        vk = lax.dot_general(v * wp_row, phi_k, (((1,), (1,)), ((), ())),
                             preferred_element_type=jnp.float32)            # (16, 32)
        return jnp.clip(vk, -ABS_MAX, ABS_MAX) * hmask_t

    vk0 = kv_for(rowp_ref[_RP_WP0:_RP_WP0 + 1, :])
    vk1 = kv_for(rowp_ref[_RP_WP1:_RP_WP1 + 1, :])

    # ---- attention bias: spatial avg-pool per sample -> LayerNorm over v_dim ----
    bln_g = cvec_ref[_CV_BLN_G:_CV_BLN_G + V_DIM, :]
    bln_b = cvec_ref[_CV_BLN_B:_CV_BLN_B + V_DIM, :]

    def bias_for(mask):
        p = jnp.sum(bp * mask, axis=1, keepdims=True) * inv_n               # (16, 1)
        pm = jnp.mean(p, axis=0, keepdims=True)
        pv = jnp.mean(p * p, axis=0, keepdims=True) - pm * pm
        return (p - pm) * lax.rsqrt(pv + EPS) * bln_g + bln_b

    bias = bias_for(m0) * m0 + bias_for(m1) * m1                            # (16, 128)

    # ---- QKV = KV_b @ phi_Q per sample, kept 128-lane dense via the batch masks ----
    qkv = (jnp.dot(vk0, phi_q, preferred_element_type=jnp.float32) * m0
           + jnp.dot(vk1, phi_q, preferred_element_type=jnp.float32) * m1
           + bias)                                                          # (16, 128)

    # ---- head unification + depthwise 1x1 conv on V + LayerNorm (no affine) ----
    y = (jnp.dot(wm_ref[_WM_WU:_WM_WU + EMBED, :], qkv,
                 preferred_element_type=jnp.float32)
         + cvec_ref[_CV_BU:_CV_BU + EMBED, :]
         + v * cvec_ref[_CV_DWC_W:_CV_DWC_W + V_DIM, :]
         + cvec_ref[_CV_DWC_B:_CV_DWC_B + V_DIM, :])
    attn = per_sample_norm(y)

    # ---- residual + LayerNorm2 (affine) ----
    x2 = (per_sample_norm(x + attn) * rowp_ref[_RP_LN2W:_RP_LN2W + EMBED, :]
          + rowp_ref[_RP_LN2B:_RP_LN2B + EMBED, :])

    # ---- feed-forward: 1x1 conv -> exact (erf) GELU -> 1x1 conv, + residual ----
    h1 = _gelu(jnp.dot(wm_ref[_WM_W1:_WM_W1 + HIDDEN, :], x2,
                       preferred_element_type=jnp.float32)
               + cvec_ref[_CV_B1:_CV_B1 + HIDDEN, :])
    ff = (jnp.dot(w2h_ref[_W2_ROW:_W2_ROW + EMBED, :], h1,
                  preferred_element_type=jnp.float32)
          + cvec_ref[_CV_B2:_CV_B2 + EMBED, :])
    o_ref[...] = x2 + ff


# ------------------------------ constants & params ------------------------------
def _pool_weights():
    # F.interpolate(..., size=(1,1), mode='bilinear', align_corners=False): the single
    # output pixel is a 2-tap-per-axis weighted average around the spatial center.
    def w1d(n):
        v = np.zeros((n,), np.float64)
        src = n / 2.0 - 0.5
        i0 = max(int(np.floor(src)), 0)
        i1 = min(i0 + 1, n - 1)
        f = src - i0
        v[i0] += 1.0 - f
        v[i1] += f
        return v
    return (w1d(H)[:, None] * w1d(W)[None, :]).reshape(1, N).astype(np.float32)


def _head_mask_t():
    # (V_DIM, Q_DIM): keep (cv, cq) only when both channels belong to the same head
    m = (np.arange(Q_DIM)[None, :] // DQH) == (np.arange(V_DIM)[:, None] // DVH)
    return m.astype(np.float32)


def init_params(key):
    ks = jax.random.split(key, 9)

    def conv_wb(k, cin, cout):
        kw, kb = jax.random.split(k)
        bound = 1.0 / float(np.sqrt(cin))        # kernel_size=1 -> fan_in = cin
        return (jax.random.uniform(kw, (cout, cin), jnp.float32, -bound, bound),
                jax.random.uniform(kb, (cout, 1), jnp.float32, -bound, bound))

    p = {}
    wq, bq = conv_wb(ks[0], EMBED, Q_DIM)
    wk, bk = conv_wb(ks[1], EMBED, Q_DIM)
    wv, bv = conv_wb(ks[2], EMBED, V_DIM)
    wb, bb = conv_wb(ks[3], EMBED, V_DIM)                       # bias_net conv
    # merged projection rows: [0:32)=Q, [32:64)=K, [64:80)=V, [80:96)=bias-net
    p["wqkvb"] = jnp.concatenate([wq, wk, wv, wb], axis=0)      # (96, EMBED)
    p["bqkvb"] = jnp.concatenate([bq, bk, bv, bb], axis=0)      # (96, 1)
    p["bias_ln_g"] = jnp.ones((V_DIM, 1), jnp.float32)          # LayerNorm(v_dim) affine
    p["bias_ln_b"] = jnp.zeros((V_DIM, 1), jnp.float32)
    p["wu"], p["bu"] = conv_wb(ks[4], V_DIM, EMBED)             # head_unification
    # depthwise 1x1 conv acts on per-head channels -> its (DVH,) params repeat per head
    dwc_w = jax.random.uniform(ks[5], (DVH,), jnp.float32, -1.0, 1.0)
    dwc_b = jax.random.uniform(ks[6], (DVH,), jnp.float32, -1.0, 1.0)
    p["dwc_w"] = jnp.tile(dwc_w, HEADS).reshape(V_DIM, 1)
    p["dwc_b"] = jnp.tile(dwc_b, HEADS).reshape(V_DIM, 1)
    # LayerNorm((embed, H, W)) affine params stored channels-first (E, H*W)
    p["ln1_w"] = jnp.ones((EMBED, N), jnp.float32)
    p["ln1_b"] = jnp.zeros((EMBED, N), jnp.float32)
    p["ln2_w"] = jnp.ones((EMBED, N), jnp.float32)
    p["ln2_b"] = jnp.zeros((EMBED, N), jnp.float32)
    # feed-forward 1x1 convs
    p["w1"], p["b1"] = conv_wb(ks[7], EMBED, HIDDEN)
    p["w2"], p["b2"] = conv_wb(ks[8], HIDDEN, EMBED)
    return p


def pack_inputs(p):
    """Pack all module parameters (+ constants) into 4 kernel inputs (done once)."""
    wm = jnp.concatenate([p["wqkvb"], p["wu"], p["w1"]], axis=0)                 # (144, 16)
    assert wm.shape == (WMAT_ROWS, EMBED)

    w2h = jnp.concatenate([p["w2"], jnp.asarray(_head_mask_t())], axis=0)        # (32, 32)

    cvec = jnp.concatenate([p["bqkvb"], p["bu"], p["dwc_w"], p["dwc_b"],
                            p["bias_ln_g"], p["bias_ln_b"], p["b1"], p["b2"]],
                           axis=0)                                               # (224, 1)
    assert cvec.shape == (CVEC_ROWS, 1)

    wpool = np.tile(_pool_weights(), (1, B))                                     # (1, 128)
    m0 = np.concatenate([np.ones((1, N), np.float32),
                         np.zeros((1, N), np.float32)], axis=1)                  # batch-0 lanes
    m1 = (1.0 - m0).astype(np.float32)

    def row8(r):   # put a (1, BN) row at the start of its own 8-sublane group
        return np.concatenate([r.astype(np.float32), np.zeros((7, BN), np.float32)], axis=0)

    rowp = jnp.concatenate([
        jnp.tile(p["ln1_w"], (1, B)), jnp.tile(p["ln1_b"], (1, B)),
        jnp.tile(p["ln2_w"], (1, B)), jnp.tile(p["ln2_b"], (1, B)),
        jnp.asarray(row8(wpool * m0)), jnp.asarray(row8(wpool * m1)),
        jnp.asarray(row8(m0)), jnp.asarray(row8(m1))], axis=0)                   # (96, 128)
    assert rowp.shape == (ROWP_ROWS, BN)

    return {"wm": wm, "w2h": w2h, "rowp": rowp, "cvec": cvec}


# ------------------------------ wrapper ------------------------------
def fc_transformer_block(x_nchw, packed):
    # NCHW (B,E,H,W) -> lane-dense (E, B*H*W): one tiny wrapper-side transpose so the
    # kernel sees full 128-lane tiles and writes one unmasked (16,128) output slab.
    x = jnp.transpose(x_nchw.reshape(B, EMBED, N), (1, 0, 2)).reshape(EMBED, BN)
    x = x.astype(jnp.float32)

    args = (x, packed["wm"], packed["w2h"], packed["rowp"], packed["cvec"])

    def full_spec(a):
        nd = a.ndim
        return pl.BlockSpec(a.shape, lambda i, _nd=nd: (0,) * _nd)

    out = pl.pallas_call(
        fused_block_kernel,
        grid=(1,),                                   # single fused step, all data VMEM resident
        in_specs=[full_spec(a) for a in args],
        out_specs=pl.BlockSpec((EMBED, BN), lambda i: (0, 0)),
        out_shape=jax.ShapeDtypeStruct((EMBED, BN), jnp.float32),
        compiler_params=pltpu.CompilerParams(dimension_semantics=("arbitrary",)),
    )(*args)

    # back to NCHW
    return jnp.transpose(out.reshape(EMBED, B, N), (1, 0, 2)).reshape(B, EMBED, H, W)


if __name__ == "__main__":
    key = jax.random.PRNGKey(0)
    pkey, xkey = jax.random.split(key)
    params = init_params(pkey)
    packed = pack_inputs(params)
    x = jax.random.normal(xkey, (B, EMBED, H, W), jnp.float32)   # NCHW, like torch
    y = jax.jit(fc_transformer_block)(x, packed)
    y = jax.block_until_ready(y)
    assert y.shape == (B, EMBED, H, W)
    assert bool(jnp.all(jnp.isfinite(y)))
    print("KERNEL_OK")
</pallas_src>

<mosaic_0001>
module attributes {stable_mosaic.version = 11 : i64} {
  func.func @fused_block_kernel(%arg0: i32, %arg1: memref<16x128xf32, #tpu.memory_space<vmem>>, %arg2: memref<144x16xf32, #tpu.memory_space<vmem>>, %arg3: memref<32x32xf32, #tpu.memory_space<vmem>>, %arg4: memref<96x128xf32, #tpu.memory_space<vmem>>, %arg5: memref<224x1xf32, #tpu.memory_space<vmem>>, %arg6: memref<16x128xf32, #tpu.memory_space<vmem>>) attributes {dimension_semantics = [#tpu.dimension_semantics<arbitrary>], iteration_bounds = array<i64: 1>, scalar_prefetch = 0 : i64, scratch_operands = 0 : i64, tpu.core_type = #tpu.core_type<tc>, window_params = [{pipeline_mode = #tpu.pipeline_mode<synchronous>, transform_indices = @transform_0, window_bounds = array<i64: 16, 128>}, {pipeline_mode = #tpu.pipeline_mode<synchronous>, transform_indices = @transform_1, window_bounds = array<i64: 144, 16>}, {pipeline_mode = #tpu.pipeline_mode<synchronous>, transform_indices = @transform_2, window_bounds = array<i64: 32, 32>}, {pipeline_mode = #tpu.pipeline_mode<synchronous>, transform_indices = @transform_3, window_bounds = array<i64: 96, 128>}, {pipeline_mode = #tpu.pipeline_mode<synchronous>, transform_indices = @transform_4, window_bounds = array<i64: 224, 1>}, {pipeline_mode = #tpu.pipeline_mode<synchronous>, transform_indices = @transform_5, window_bounds = array<i64: 16, 128>}]} {
    %c80 = arith.constant 80 : index
    %c0 = arith.constant 0 : index
    %0 = vector.load %arg4[%c80, %c0] : memref<96x128xf32, #tpu.memory_space<vmem>>, vector<1x128xf32>
    %c88 = arith.constant 88 : index
    %c0_0 = arith.constant 0 : index
    %1 = vector.load %arg4[%c88, %c0_0] : memref<96x128xf32, #tpu.memory_space<vmem>>, vector<1x128xf32>
    %c0_1 = arith.constant 0 : index
    %c0_2 = arith.constant 0 : index
    %2 = vector.load %arg1[%c0_1, %c0_2] : memref<16x128xf32, #tpu.memory_space<vmem>>, vector<16x128xf32>
    %cst = arith.constant dense<0.000000e+00> : vector<128xf32>
    %3 = vector.multi_reduction <add>, %2, %cst [0] : vector<16x128xf32> to vector<128xf32>
    %4 = vector.shape_cast %3 : vector<128xf32> to vector<1x128xf32>
    %5 = arith.mulf %2, %2 : vector<16x128xf32>
    %cst_3 = arith.constant dense<0.000000e+00> : vector<128xf32>
    %6 = vector.multi_reduction <add>, %5, %cst_3 [0] : vector<16x128xf32> to vector<128xf32>
    %7 = vector.shape_cast %6 : vector<128xf32> to vector<1x128xf32>
    %8 = arith.mulf %4, %0 : vector<1x128xf32>
    %cst_4 = arith.constant dense<0.000000e+00> : vector<1xf32>
    %9 = vector.multi_reduction <add>, %8, %cst_4 [1] : vector<1x128xf32> to vector<1xf32>
    %10 = vector.shape_cast %9 : vector<1xf32> to vector<1x1xf32>
    %11 = arith.mulf %4, %1 : vector<1x128xf32>
    %cst_5 = arith.constant dense<0.000000e+00> : vector<1xf32>
    %12 = vector.multi_reduction <add>, %11, %cst_5 [1] : vector<1x128xf32> to vector<1xf32>
    %13 = vector.shape_cast %12 : vector<1xf32> to vector<1x1xf32>
    %14 = arith.mulf %7, %0 : vector<1x128xf32>
    %cst_6 = arith.constant dense<0.000000e+00> : vector<1xf32>
    %15 = vector.multi_reduction <add>, %14, %cst_6 [1] : vector<1x128xf32> to vector<1xf32>
    %16 = vector.shape_cast %15 : vector<1xf32> to vector<1x1xf32>
    %17 = arith.mulf %7, %1 : vector<1x128xf32>
    %cst_7 = arith.constant dense<0.000000e+00> : vector<1xf32>
    %18 = vector.multi_reduction <add>, %17, %cst_7 [1] : vector<1x128xf32> to vector<1xf32>
    %19 = vector.shape_cast %18 : vector<1xf32> to vector<1x1xf32>
    %20 = vector.broadcast %10 : vector<1x1xf32> to vector<1x128xf32>
    %21 = arith.mulf %20, %0 : vector<1x128xf32>
    %22 = vector.broadcast %13 : vector<1x1xf32> to vector<1x128xf32>
    %23 = arith.mulf %22, %1 : vector<1x128xf32>
    %24 = arith.addf %21, %23 : vector<1x128xf32>
    %cst_8 = arith.constant 9.765625E-4 : f32
    %25 = vector.broadcast %cst_8 : f32 to vector<1x128xf32>
    %26 = arith.mulf %24, %25 : vector<1x128xf32>
    %27 = vector.broadcast %16 : vector<1x1xf32> to vector<1x128xf32>
    %28 = arith.mulf %27, %0 : vector<1x128xf32>
    %29 = vector.broadcast %19 : vector<1x1xf32> to vector<1x128xf32>
    %30 = arith.mulf %29, %1 : vector<1x128xf32>
    %31 = arith.addf %28, %30 : vector<1x128xf32>
    %cst_9 = arith.constant 9.765625E-4 : f32
    %32 = vector.broadcast %cst_9 : f32 to vector<1x128xf32>
    %33 = arith.mulf %31, %32 : vector<1x128xf32>
    %34 = arith.mulf %26, %26 : vector<1x128xf32>
    %35 = arith.subf %33, %34 : vector<1x128xf32>
    %36 = vector.broadcast %26 : vector<1x128xf32> to vector<16x128xf32>
    %37 = arith.subf %2, %36 : vector<16x128xf32>
    %cst_10 = arith.constant 9.99999974E-6 : f32
    %38 = vector.broadcast %cst_10 : f32 to vector<1x128xf32>
    %39 = arith.addf %35, %38 : vector<1x128xf32>
    %40 = math.rsqrt %39 : vector<1x128xf32>
    %41 = vector.broadcast %40 : vector<1x128xf32> to vector<16x128xf32>
    %42 = arith.mulf %37, %41 : vector<16x128xf32>
    %c0_11 = arith.constant 0 : index
    %c0_12 = arith.constant 0 : index
    %43 = vector.load %arg4[%c0_11, %c0_12] : memref<96x128xf32, #tpu.memory_space<vmem>>, vector<16x128xf32>
    %44 = arith.mulf %42, %43 : vector<16x128xf32>
    %c16 = arith.constant 16 : index
    %c0_13 = arith.constant 0 : index
    %45 = vector.load %arg4[%c16, %c0_13] : memref<96x128xf32, #tpu.memory_space<vmem>>, vector<16x128xf32>
    %46 = arith.addf %44, %45 : vector<16x128xf32>
    %c0_14 = arith.constant 0 : index
    %c0_15 = arith.constant 0 : index
    %47 = vector.load %arg2[%c0_14, %c0_15] : memref<144x16xf32, #tpu.memory_space<vmem>>, vector<96x16xf32>
    %cst_16 = arith.constant dense<0.000000e+00> : vector<96x128xf32>
    %48 = tpu.matmul %47, %46, %cst_16 {dimension_numbers = #tpu.dot_dimension_numbers<[1], [0], [0], [1], [0, 0, 1, 1], [], []>} : vector<96x16xf32>, vector<16x128xf32>, vector<96x128xf32> -> vector<96x128xf32>
    %c0_17 = arith.constant 0 : index
    %c0_18 = arith.constant 0 : index
    %49 = vector.load %arg5[%c0_17, %c0_18] : memref<224x1xf32, #tpu.memory_space<vmem>>, vector<96x1xf32>
    %50 = vector.broadcast %49 : vector<96x1xf32> to vector<96x128xf32>
    %51 = arith.addf %48, %50 : vector<96x128xf32>
    %52 = vector.extract_strided_slice %51 {offsets = [0, 0], sizes = [32, 128], strides = [1, 1]} : vector<96x128xf32> to vector<32x128xf32>
    %cst_19 = arith.constant 0.000000e+00 : f32
    %53 = vector.broadcast %cst_19 : f32 to vector<32x128xf32>
    %54 = arith.maximumf %52, %53 : vector<32x128xf32>
    %55 = arith.mulf %54, %54 : vector<32x128xf32>
    %56 = vector.extract_strided_slice %51 {offsets = [32, 0], sizes = [32, 128], strides = [1, 1]} : vector<96x128xf32> to vector<32x128xf32>
    %cst_20 = arith.constant 0.000000e+00 : f32
    %57 = vector.broadcast %cst_20 : f32 to vector<32x128xf32>
    %58 = arith.maximumf %56, %57 : vector<32x128xf32>
    %59 = arith.mulf %58, %58 : vector<32x128xf32>
    %60 = vector.extract_strided_slice %51 {offsets = [64, 0], sizes = [16, 128], strides = [1, 1]} : vector<96x128xf32> to vector<16x128xf32>
    %61 = vector.extract_strided_slice %51 {offsets = [80, 0], sizes = [16, 128], strides = [1, 1]} : vector<96x128xf32> to vector<16x128xf32>
    %cst_21 = arith.constant dense<0.000000e+00> : vector<32xf32>
    %62 = vector.multi_reduction <add>, %55, %cst_21 [1] : vector<32x128xf32> to vector<32xf32>
    %63 = vector.shape_cast %62 : vector<32xf32> to vector<32x1xf32>
    %cst_22 = arith.constant dense<0.000000e+00> : vector<1xf32>
    %64 = vector.multi_reduction <add>, %63, %cst_22 [0] : vector<32x1xf32> to vector<1xf32>
    %65 = vector.shape_cast %64 : vector<1xf32> to vector<1x1xf32>
    %66 = arith.mulf %55, %55 : vector<32x128xf32>
    %cst_23 = arith.constant dense<0.000000e+00> : vector<32xf32>
    %67 = vector.multi_reduction <add>, %66, %cst_23 [1] : vector<32x128xf32> to vector<32xf32>
    %68 = vector.shape_cast %67 : vector<32xf32> to vector<32x1xf32>
    %cst_24 = arith.constant dense<0.000000e+00> : vector<1xf32>
    %69 = vector.multi_reduction <add>, %68, %cst_24 [0] : vector<32x1xf32> to vector<1xf32>
    %70 = vector.shape_cast %69 : vector<1xf32> to vector<1x1xf32>
    %cst_25 = arith.constant dense<0.000000e+00> : vector<32xf32>
    %71 = vector.multi_reduction <add>, %59, %cst_25 [1] : vector<32x128xf32> to vector<32xf32>
    %72 = vector.shape_cast %71 : vector<32xf32> to vector<32x1xf32>
    %cst_26 = arith.constant dense<0.000000e+00> : vector<1xf32>
    %73 = vector.multi_reduction <add>, %72, %cst_26 [0] : vector<32x1xf32> to vector<1xf32>
    %74 = vector.shape_cast %73 : vector<1xf32> to vector<1x1xf32>
    %75 = arith.mulf %59, %59 : vector<32x128xf32>
    %cst_27 = arith.constant dense<0.000000e+00> : vector<32xf32>
    %76 = vector.multi_reduction <add>, %75, %cst_27 [1] : vector<32x128xf32> to vector<32xf32>
    %77 = vector.shape_cast %76 : vector<32xf32> to vector<32x1xf32>
    %cst_28 = arith.constant dense<0.000000e+00> : vector<1xf32>
    %78 = vector.multi_reduction <add>, %77, %cst_28 [0] : vector<32x1xf32> to vector<1xf32>
    %79 = vector.shape_cast %78 : vector<1xf32> to vector<1x1xf32>
    %80 = math.sqrt %65 : vector<1x1xf32>
    %81 = math.rsqrt %70 : vector<1x1xf32>
    %82 = arith.mulf %80, %81 : vector<1x1xf32>
    %83 = vector.broadcast %82 : vector<1x1xf32> to vector<32x128xf32>
    %84 = arith.mulf %83, %55 : vector<32x128xf32>
    %85 = math.sqrt %74 : vector<1x1xf32>
    %86 = math.rsqrt %79 : vector<1x1xf32>
    %87 = arith.mulf %85, %86 : vector<1x1xf32>
    %88 = vector.broadcast %87 : vector<1x1xf32> to vector<32x128xf32>
    %89 = arith.mulf %88, %59 : vector<32x128xf32>
    %c16_29 = arith.constant 16 : index
    %c0_30 = arith.constant 0 : index
    %90 = vector.load %arg3[%c16_29, %c0_30] : memref<32x32xf32, #tpu.memory_space<vmem>>, vector<16x32xf32>
    %c64 = arith.constant 64 : index
    %c0_31 = arith.constant 0 : index
    %91 = vector.load %arg4[%c64, %c0_31] : memref<96x128xf32, #tpu.memory_space<vmem>>, vector<1x128xf32>
    %92 = vector.broadcast %91 : vector<1x128xf32> to vector<16x128xf32>
    %93 = arith.mulf %60, %92 : vector<16x128xf32>
    %cst_32 = arith.constant dense<0.000000e+00> : vector<16x32xf32>
    %94 = tpu.matmul %93, %89, %cst_32 {dimension_numbers = #tpu.dot_dimension_numbers<[1], [1], [0], [0], [0, 0, 1, 0], [], []>} : vector<16x128xf32>, vector<32x128xf32>, vector<16x32xf32> -> vector<16x32xf32>
    %cst_33 = arith.constant -3.200000e+01 : f32
    %cst_34 = arith.constant 3.200000e+01 : f32
    %95 = vector.broadcast %cst_33 : f32 to vector<16x32xf32>
    %96 = arith.maximumf %95, %94 : vector<16x32xf32>
    %97 = vector.broadcast %cst_34 : f32 to vector<16x32xf32>
    %98 = arith.minimumf %97, %96 : vector<16x32xf32>
    %99 = arith.mulf %98, %90 : vector<16x32xf32>
    %c72 = arith.constant 72 : index
    %c0_35 = arith.constant 0 : index
    %100 = vector.load %arg4[%c72, %c0_35] : memref<96x128xf32, #tpu.memory_space<vmem>>, vector<1x128xf32>
    %101 = vector.broadcast %100 : vector<1x128xf32> to vector<16x128xf32>
    %102 = arith.mulf %60, %101 : vector<16x128xf32>
    %cst_36 = arith.constant dense<0.000000e+00> : vector<16x32xf32>
    %103 = tpu.matmul %102, %89, %cst_36 {dimension_numbers = #tpu.dot_dimension_numbers<[1], [1], [0], [0], [0, 0, 1, 0], [], []>} : vector<16x128xf32>, vector<32x128xf32>, vector<16x32xf32> -> vector<16x32xf32>
    %cst_37 = arith.constant -3.200000e+01 : f32
    %cst_38 = arith.constant 3.200000e+01 : f32
    %104 = vector.broadcast %cst_37 : f32 to vector<16x32xf32>
    %105 = arith.maximumf %104, %103 : vector<16x32xf32>
    %106 = vector.broadcast %cst_38 : f32 to vector<16x32xf32>
    %107 = arith.minimumf %106, %105 : vector<16x32xf32>
    %108 = arith.mulf %107, %90 : vector<16x32xf32>
    %c144 = arith.constant 144 : index
    %c0_39 = arith.constant 0 : index
    %109 = vector.load %arg5[%c144, %c0_39] : memref<224x1xf32, #tpu.memory_space<vmem>>, vector<16x1xf32>
    %c160 = arith.constant 160 : index
    %c0_40 = arith.constant 0 : index
    %110 = vector.load %arg5[%c160, %c0_40] : memref<224x1xf32, #tpu.memory_space<vmem>>, vector<16x1xf32>
    %111 = vector.broadcast %0 : vector<1x128xf32> to vector<16x128xf32>
    %112 = arith.mulf %61, %111 : vector<16x128xf32>
    %cst_41 = arith.constant dense<0.000000e+00> : vector<16xf32>
    %113 = vector.multi_reduction <add>, %112, %cst_41 [1] : vector<16x128xf32> to vector<16xf32>
    %114 = vector.shape_cast %113 : vector<16xf32> to vector<16x1xf32>
    %cst_42 = arith.constant 1.562500e-02 : f32
    %115 = vector.broadcast %cst_42 : f32 to vector<16x1xf32>
    %116 = arith.mulf %114, %115 : vector<16x1xf32>
    %cst_43 = arith.constant dense<0.000000e+00> : vector<1xf32>
    %117 = vector.multi_reduction <add>, %116, %cst_43 [0] : vector<16x1xf32> to vector<1xf32>
    %118 = vector.shape_cast %117 : vector<1xf32> to vector<1x1xf32>
    %cst_44 = arith.constant 1.600000e+01 : f32
    %119 = vector.broadcast %cst_44 : f32 to vector<1x1xf32>
    %120 = arith.divf %118, %119 : vector<1x1xf32>
    %121 = arith.mulf %116, %116 : vector<16x1xf32>
    %cst_45 = arith.constant dense<0.000000e+00> : vector<1xf32>
    %122 = vector.multi_reduction <add>, %121, %cst_45 [0] : vector<16x1xf32> to vector<1xf32>
    %123 = vector.shape_cast %122 : vector<1xf32> to vector<1x1xf32>
    %cst_46 = arith.constant 1.600000e+01 : f32
    %124 = vector.broadcast %cst_46 : f32 to vector<1x1xf32>
    %125 = arith.divf %123, %124 : vector<1x1xf32>
    %126 = arith.mulf %120, %120 : vector<1x1xf32>
    %127 = arith.subf %125, %126 : vector<1x1xf32>
    %128 = vector.broadcast %120 : vector<1x1xf32> to vector<16x1xf32>
    %129 = arith.subf %116, %128 : vector<16x1xf32>
    %cst_47 = arith.constant 9.99999974E-6 : f32
    %130 = vector.broadcast %cst_47 : f32 to vector<1x1xf32>
    %131 = arith.addf %127, %130 : vector<1x1xf32>
    %132 = math.rsqrt %131 : vector<1x1xf32>
    %133 = vector.broadcast %132 : vector<1x1xf32> to vector<16x1xf32>
    %134 = arith.mulf %129, %133 : vector<16x1xf32>
    %135 = arith.mulf %134, %109 : vector<16x1xf32>
    %136 = arith.addf %135, %110 : vector<16x1xf32>
    %137 = vector.broadcast %136 : vector<16x1xf32> to vector<16x128xf32>
    %138 = vector.broadcast %0 : vector<1x128xf32> to vector<16x128xf32>
    %139 = arith.mulf %137, %138 : vector<16x128xf32>
    %140 = vector.broadcast %1 : vector<1x128xf32> to vector<16x128xf32>
    %141 = arith.mulf %61, %140 : vector<16x128xf32>
    %cst_48 = arith.constant dense<0.000000e+00> : vector<16xf32>
    %142 = vector.multi_reduction <add>, %141, %cst_48 [1] : vector<16x128xf32> to vector<16xf32>
    %143 = vector.shape_cast %142 : vector<16xf32> to vector<16x1xf32>
    %cst_49 = arith.constant 1.562500e-02 : f32
    %144 = vector.broadcast %cst_49 : f32 to vector<16x1xf32>
    %145 = arith.mulf %143, %144 : vector<16x1xf32>
    %cst_50 = arith.constant dense<0.000000e+00> : vector<1xf32>
    %146 = vector.multi_reduction <add>, %145, %cst_50 [0] : vector<16x1xf32> to vector<1xf32>
    %147 = vector.shape_cast %146 : vector<1xf32> to vector<1x1xf32>
    %cst_51 = arith.constant 1.600000e+01 : f32
    %148 = vector.broadcast %cst_51 : f32 to vector<1x1xf32>
    %149 = arith.divf %147, %148 : vector<1x1xf32>
    %150 = arith.mulf %145, %145 : vector<16x1xf32>
    %cst_52 = arith.constant dense<0.000000e+00> : vector<1xf32>
    %151 = vector.multi_reduction <add>, %150, %cst_52 [0] : vector<16x1xf32> to vector<1xf32>
    %152 = vector.shape_cast %151 : vector<1xf32> to vector<1x1xf32>
    %cst_53 = arith.constant 1.600000e+01 : f32
    %153 = vector.broadcast %cst_53 : f32 to vector<1x1xf32>
    %154 = arith.divf %152, %153 : vector<1x1xf32>
    %155 = arith.mulf %149, %149 : vector<1x1xf32>
    %156 = arith.subf %154, %155 : vector<1x1xf32>
    %157 = vector.broadcast %149 : vector<1x1xf32> to vector<16x1xf32>
    %158 = arith.subf %145, %157 : vector<16x1xf32>
    %cst_54 = arith.constant 9.99999974E-6 : f32
    %159 = vector.broadcast %cst_54 : f32 to vector<1x1xf32>
    %160 = arith.addf %156, %159 : vector<1x1xf32>
    %161 = math.rsqrt %160 : vector<1x1xf32>
    %162 = vector.broadcast %161 : vector<1x1xf32> to vector<16x1xf32>
    %163 = arith.mulf %158, %162 : vector<16x1xf32>
    %164 = arith.mulf %163, %109 : vector<16x1xf32>
    %165 = arith.addf %164, %110 : vector<16x1xf32>
    %166 = vector.broadcast %165 : vector<16x1xf32> to vector<16x128xf32>
    %167 = vector.broadcast %1 : vector<1x128xf32> to vector<16x128xf32>
    %168 = arith.mulf %166, %167 : vector<16x128xf32>
    %169 = arith.addf %139, %168 : vector<16x128xf32>
    %cst_55 = arith.constant dense<0.000000e+00> : vector<16x128xf32>
    %170 = tpu.matmul %99, %84, %cst_55 {dimension_numbers = #tpu.dot_dimension_numbers<[1], [0], [0], [1], [0, 0, 1, 1], [], []>} : vector<16x32xf32>, vector<32x128xf32>, vector<16x128xf32> -> vector<16x128xf32>
    %171 = vector.broadcast %0 : vector<1x128xf32> to vector<16x128xf32>
    %172 = arith.mulf %170, %171 : vector<16x128xf32>
    %cst_56 = arith.constant dense<0.000000e+00> : vector<16x128xf32>
    %173 = tpu.matmul %108, %84, %cst_56 {dimension_numbers = #tpu.dot_dimension_numbers<[1], [0], [0], [1], [0, 0, 1, 1], [], []>} : vector<16x32xf32>, vector<32x128xf32>, vector<16x128xf32> -> vector<16x128xf32>
    %174 = vector.broadcast %1 : vector<1x128xf32> to vector<16x128xf32>
    %175 = arith.mulf %173, %174 : vector<16x128xf32>
    %176 = arith.addf %172, %175 : vector<16x128xf32>
    %177 = arith.addf %176, %169 : vector<16x128xf32>
    %c96 = arith.constant 96 : index
    %c0_57 = arith.constant 0 : index
    %178 = vector.load %arg2[%c96, %c0_57] : memref<144x16xf32, #tpu.memory_space<vmem>>, vector<16x16xf32>
    %cst_58 = arith.constant dense<0.000000e+00> : vector<16x128xf32>
    %179 = tpu.matmul %178, %177, %cst_58 {dimension_numbers = #tpu.dot_dimension_numbers<[1], [0], [0], [1], [0, 0, 1, 1], [], []>} : vector<16x16xf32>, vector<16x128xf32>, vector<16x128xf32> -> vector<16x128xf32>
    %c96_59 = arith.constant 96 : index
    %c0_60 = arith.constant 0 : index
    %180 = vector.load %arg5[%c96_59, %c0_60] : memref<224x1xf32, #tpu.memory_space<vmem>>, vector<16x1xf32>
    %181 = vector.broadcast %180 : vector<16x1xf32> to vector<16x128xf32>
    %182 = arith.addf %179, %181 : vector<16x128xf32>
    %c112 = arith.constant 112 : index
    %c0_61 = arith.constant 0 : index
    %183 = vector.load %arg5[%c112, %c0_61] : memref<224x1xf32, #tpu.memory_space<vmem>>, vector<16x1xf32>
    %184 = vector.broadcast %183 : vector<16x1xf32> to vector<16x128xf32>
    %185 = arith.mulf %60, %184 : vector<16x128xf32>
    %186 = arith.addf %182, %185 : vector<16x128xf32>
    %c128 = arith.constant 128 : index
    %c0_62 = arith.constant 0 : index
    %187 = vector.load %arg5[%c128, %c0_62] : memref<224x1xf32, #tpu.memory_space<vmem>>, vector<16x1xf32>
    %188 = vector.broadcast %187 : vector<16x1xf32> to vector<16x128xf32>
    %189 = arith.addf %186, %188 : vector<16x128xf32>
    %cst_63 = arith.constant dense<0.000000e+00> : vector<128xf32>
    %190 = vector.multi_reduction <add>, %189, %cst_63 [0] : vector<16x128xf32> to vector<128xf32>
    %191 = vector.shape_cast %190 : vector<128xf32> to vector<1x128xf32>
    %192 = arith.mulf %189, %189 : vector<16x128xf32>
    %cst_64 = arith.constant dense<0.000000e+00> : vector<128xf32>
    %193 = vector.multi_reduction <add>, %192, %cst_64 [0] : vector<16x128xf32> to vector<128xf32>
    %194 = vector.shape_cast %193 : vector<128xf32> to vector<1x128xf32>
    %195 = arith.mulf %191, %0 : vector<1x128xf32>
    %cst_65 = arith.constant dense<0.000000e+00> : vector<1xf32>
    %196 = vector.multi_reduction <add>, %195, %cst_65 [1] : vector<1x128xf32> to vector<1xf32>
    %197 = vector.shape_cast %196 : vector<1xf32> to vector<1x1xf32>
    %198 = arith.mulf %191, %1 : vector<1x128xf32>
    %cst_66 = arith.constant dense<0.000000e+00> : vector<1xf32>
    %199 = vector.multi_reduction <add>, %198, %cst_66 [1] : vector<1x128xf32> to vector<1xf32>
    %200 = vector.shape_cast %199 : vector<1xf32> to vector<1x1xf32>
    %201 = arith.mulf %194, %0 : vector<1x128xf32>
    %cst_67 = arith.constant dense<0.000000e+00> : vector<1xf32>
    %202 = vector.multi_reduction <add>, %201, %cst_67 [1] : vector<1x128xf32> to vector<1xf32>
    %203 = vector.shape_cast %202 : vector<1xf32> to vector<1x1xf32>
    %204 = arith.mulf %194, %1 : vector<1x128xf32>
    %cst_68 = arith.constant dense<0.000000e+00> : vector<1xf32>
    %205 = vector.multi_reduction <add>, %204, %cst_68 [1] : vector<1x128xf32> to vector<1xf32>
    %206 = vector.shape_cast %205 : vector<1xf32> to vector<1x1xf32>
    %207 = vector.broadcast %197 : vector<1x1xf32> to vector<1x128xf32>
    %208 = arith.mulf %207, %0 : vector<1x128xf32>
    %209 = vector.broadcast %200 : vector<1x1xf32> to vector<1x128xf32>
    %210 = arith.mulf %209, %1 : vector<1x128xf32>
    %211 = arith.addf %208, %210 : vector<1x128xf32>
    %cst_69 = arith.constant 9.765625E-4 : f32
    %212 = vector.broadcast %cst_69 : f32 to vector<1x128xf32>
    %213 = arith.mulf %211, %212 : vector<1x128xf32>
    %214 = vector.broadcast %203 : vector<1x1xf32> to vector<1x128xf32>
    %215 = arith.mulf %214, %0 : vector<1x128xf32>
    %216 = vector.broadcast %206 : vector<1x1xf32> to vector<1x128xf32>
    %217 = arith.mulf %216, %1 : vector<1x128xf32>
    %218 = arith.addf %215, %217 : vector<1x128xf32>
    %cst_70 = arith.constant 9.765625E-4 : f32
    %219 = vector.broadcast %cst_70 : f32 to vector<1x128xf32>
    %220 = arith.mulf %218, %219 : vector<1x128xf32>
    %221 = arith.mulf %213, %213 : vector<1x128xf32>
    %222 = arith.subf %220, %221 : vector<1x128xf32>
    %223 = vector.broadcast %213 : vector<1x128xf32> to vector<16x128xf32>
    %224 = arith.subf %189, %223 : vector<16x128xf32>
    %cst_71 = arith.constant 9.99999974E-6 : f32
    %225 = vector.broadcast %cst_71 : f32 to vector<1x128xf32>
    %226 = arith.addf %222, %225 : vector<1x128xf32>
    %227 = math.rsqrt %226 : vector<1x128xf32>
    %228 = vector.broadcast %227 : vector<1x128xf32> to vector<16x128xf32>
    %229 = arith.mulf %224, %228 : vector<16x128xf32>
    %230 = arith.addf %2, %229 : vector<16x128xf32>
    %cst_72 = arith.constant dense<0.000000e+00> : vector<128xf32>
    %231 = vector.multi_reduction <add>, %230, %cst_72 [0] : vector<16x128xf32> to vector<128xf32>
    %232 = vector.shape_cast %231 : vector<128xf32> to vector<1x128xf32>
    %233 = arith.mulf %230, %230 : vector<16x128xf32>
    %cst_73 = arith.constant dense<0.000000e+00> : vector<128xf32>
    %234 = vector.multi_reduction <add>, %233, %cst_73 [0] : vector<16x128xf32> to vector<128xf32>
    %235 = vector.shape_cast %234 : vector<128xf32> to vector<1x128xf32>
    %236 = arith.mulf %232, %0 : vector<1x128xf32>
    %cst_74 = arith.constant dense<0.000000e+00> : vector<1xf32>
    %237 = vector.multi_reduction <add>, %236, %cst_74 [1] : vector<1x128xf32> to vector<1xf32>
    %238 = vector.shape_cast %237 : vector<1xf32> to vector<1x1xf32>
    %239 = arith.mulf %232, %1 : vector<1x128xf32>
    %cst_75 = arith.constant dense<0.000000e+00> : vector<1xf32>
    %240 = vector.multi_reduction <add>, %239, %cst_75 [1] : vector<1x128xf32> to vector<1xf32>
    %241 = vector.shape_cast %240 : vector<1xf32> to vector<1x1xf32>
    %242 = arith.mulf %235, %0 : vector<1x128xf32>
    %cst_76 = arith.constant dense<0.000000e+00> : vector<1xf32>
    %243 = vector.multi_reduction <add>, %242, %cst_76 [1] : vector<1x128xf32> to vector<1xf32>
    %244 = vector.shape_cast %243 : vector<1xf32> to vector<1x1xf32>
    %245 = arith.mulf %235, %1 : vector<1x128xf32>
    %cst_77 = arith.constant dense<0.000000e+00> : vector<1xf32>
    %246 = vector.multi_reduction <add>, %245, %cst_77 [1] : vector<1x128xf32> to vector<1xf32>
    %247 = vector.shape_cast %246 : vector<1xf32> to vector<1x1xf32>
    %248 = vector.broadcast %238 : vector<1x1xf32> to vector<1x128xf32>
    %249 = arith.mulf %248, %0 : vector<1x128xf32>
    %250 = vector.broadcast %241 : vector<1x1xf32> to vector<1x128xf32>
    %251 = arith.mulf %250, %1 : vector<1x128xf32>
    %252 = arith.addf %249, %251 : vector<1x128xf32>
    %cst_78 = arith.constant 9.765625E-4 : f32
    %253 = vector.broadcast %cst_78 : f32 to vector<1x128xf32>
    %254 = arith.mulf %252, %253 : vector<1x128xf32>
    %255 = vector.broadcast %244 : vector<1x1xf32> to vector<1x128xf32>
    %256 = arith.mulf %255, %0 : vector<1x128xf32>
    %257 = vector.broadcast %247 : vector<1x1xf32> to vector<1x128xf32>
    %258 = arith.mulf %257, %1 : vector<1x128xf32>
    %259 = arith.addf %256, %258 : vector<1x128xf32>
    %cst_79 = arith.constant 9.765625E-4 : f32
    %260 = vector.broadcast %cst_79 : f32 to vector<1x128xf32>
    %261 = arith.mulf %259, %260 : vector<1x128xf32>
    %262 = arith.mulf %254, %254 : vector<1x128xf32>
    %263 = arith.subf %261, %262 : vector<1x128xf32>
    %264 = vector.broadcast %254 : vector<1x128xf32> to vector<16x128xf32>
    %265 = arith.subf %230, %264 : vector<16x128xf32>
    %cst_80 = arith.constant 9.99999974E-6 : f32
    %266 = vector.broadcast %cst_80 : f32 to vector<1x128xf32>
    %267 = arith.addf %263, %266 : vector<1x128xf32>
    %268 = math.rsqrt %267 : vector<1x128xf32>
    %269 = vector.broadcast %268 : vector<1x128xf32> to vector<16x128xf32>
    %270 = arith.mulf %265, %269 : vector<16x128xf32>
    %c32 = arith.constant 32 : index
    %c0_81 = arith.constant 0 : index
    %271 = vector.load %arg4[%c32, %c0_81] : memref<96x128xf32, #tpu.memory_space<vmem>>, vector<16x128xf32>
    %272 = arith.mulf %270, %271 : vector<16x128xf32>
    %c48 = arith.constant 48 : index
    %c0_82 = arith.constant 0 : index
    %273 = vector.load %arg4[%c48, %c0_82] : memref<96x128xf32, #tpu.memory_space<vmem>>, vector<16x128xf32>
    %274 = arith.addf %272, %273 : vector<16x128xf32>
    %c112_83 = arith.constant 112 : index
    %c0_84 = arith.constant 0 : index
    %275 = vector.load %arg2[%c112_83, %c0_84] : memref<144x16xf32, #tpu.memory_space<vmem>>, vector<32x16xf32>
    %cst_85 = arith.constant dense<0.000000e+00> : vector<32x128xf32>
    %276 = tpu.matmul %275, %274, %cst_85 {dimension_numbers = #tpu.dot_dimension_numbers<[1], [0], [0], [1], [0, 0, 1, 1], [], []>} : vector<32x16xf32>, vector<16x128xf32>, vector<32x128xf32> -> vector<32x128xf32>
    %c176 = arith.constant 176 : index
    %c0_86 = arith.constant 0 : index
    %277 = vector.load %arg5[%c176, %c0_86] : memref<224x1xf32, #tpu.memory_space<vmem>>, vector<32x1xf32>
    %278 = vector.broadcast %277 : vector<32x1xf32> to vector<32x128xf32>
    %279 = arith.addf %276, %278 : vector<32x128xf32>
    %cst_87 = arith.constant 5.000000e-01 : f32
    %280 = vector.broadcast %cst_87 : f32 to vector<32x128xf32>
    %281 = arith.mulf %280, %279 : vector<32x128xf32>
    %cst_88 = arith.constant 0.707106769 : f32
    %282 = vector.broadcast %cst_88 : f32 to vector<32x128xf32>
    %283 = arith.mulf %279, %282 : vector<32x128xf32>
    %cst_89 = arith.constant 0.000000e+00 : f32
    %284 = vector.broadcast %cst_89 : f32 to vector<32x128xf32>
    %285 = arith.cmpf oge, %283, %284 : vector<32x128xf32>
    %cst_90 = arith.constant 1.000000e+00 : f32
    %cst_91 = arith.constant -1.000000e+00 : f32
    %286 = vector.broadcast %cst_90 : f32 to vector<32x128xf32>
    %287 = vector.broadcast %cst_91 : f32 to vector<32x128xf32>
    %288 = arith.select %285, %286, %287 : vector<32x128xi1>, vector<32x128xf32>
    %289 = math.absf %283 : vector<32x128xf32>
    %cst_92 = arith.constant 0.327591091 : f32
    %290 = vector.broadcast %cst_92 : f32 to vector<32x128xf32>
    %291 = arith.mulf %290, %289 : vector<32x128xf32>
    %cst_93 = arith.constant 1.000000e+00 : f32
    %292 = vector.broadcast %cst_93 : f32 to vector<32x128xf32>
    %293 = arith.addf %292, %291 : vector<32x128xf32>
    %cst_94 = arith.constant 1.000000e+00 : f32
    %294 = vector.broadcast %cst_94 : f32 to vector<32x128xf32>
    %295 = arith.divf %294, %293 : vector<32x128xf32>
    %cst_95 = arith.constant 1.06140542 : f32
    %296 = vector.broadcast %cst_95 : f32 to vector<32x128xf32>
    %297 = arith.mulf %296, %295 : vector<32x128xf32>
    %cst_96 = arith.constant -1.45315206 : f32
    %298 = vector.broadcast %cst_96 : f32 to vector<32x128xf32>
    %299 = arith.addf %297, %298 : vector<32x128xf32>
    %300 = arith.mulf %299, %295 : vector<32x128xf32>
    %cst_97 = arith.constant 1.42141378 : f32
    %301 = vector.broadcast %cst_97 : f32 to vector<32x128xf32>
    %302 = arith.addf %300, %301 : vector<32x128xf32>
    %303 = arith.mulf %302, %295 : vector<32x128xf32>
    %cst_98 = arith.constant -0.284496725 : f32
    %304 = vector.broadcast %cst_98 : f32 to vector<32x128xf32>
    %305 = arith.addf %303, %304 : vector<32x128xf32>
    %306 = arith.mulf %305, %295 : vector<32x128xf32>
    %cst_99 = arith.constant 0.254829586 : f32
    %307 = vector.broadcast %cst_99 : f32 to vector<32x128xf32>
    %308 = arith.addf %306, %307 : vector<32x128xf32>
    %309 = arith.mulf %308, %295 : vector<32x128xf32>
    %cst_100 = arith.constant 0.000000e+00 : f32
    %310 = vector.broadcast %cst_100 : f32 to vector<32x128xf32>
    %311 = arith.subf %310, %289 : vector<32x128xf32>
    %312 = arith.mulf %311, %289 : vector<32x128xf32>
    %313 = math.exp %312 : vector<32x128xf32>
    %314 = arith.mulf %309, %313 : vector<32x128xf32>
    %cst_101 = arith.constant 1.000000e+00 : f32
    %315 = vector.broadcast %cst_101 : f32 to vector<32x128xf32>
    %316 = arith.subf %315, %314 : vector<32x128xf32>
    %317 = arith.mulf %288, %316 : vector<32x128xf32>
    %cst_102 = arith.constant 1.000000e+00 : f32
    %318 = vector.broadcast %cst_102 : f32 to vector<32x128xf32>
    %319 = arith.addf %318, %317 : vector<32x128xf32>
    %320 = arith.mulf %281, %319 : vector<32x128xf32>
    %c0_103 = arith.constant 0 : index
    %c0_104 = arith.constant 0 : index
    %321 = vector.load %arg3[%c0_103, %c0_104] : memref<32x32xf32, #tpu.memory_space<vmem>>, vector<16x32xf32>
    %cst_105 = arith.constant dense<0.000000e+00> : vector<16x128xf32>
    %322 = tpu.matmul %321, %320, %cst_105 {dimension_numbers = #tpu.dot_dimension_numbers<[1], [0], [0], [1], [0, 0, 1, 1], [], []>} : vector<16x32xf32>, vector<32x128xf32>, vector<16x128xf32> -> vector<16x128xf32>
    %c208 = arith.constant 208 : index
    %c0_106 = arith.constant 0 : index
    %323 = vector.load %arg5[%c208, %c0_106] : memref<224x1xf32, #tpu.memory_space<vmem>>, vector<16x1xf32>
    %324 = vector.broadcast %323 : vector<16x1xf32> to vector<16x128xf32>
    %325 = arith.addf %322, %324 : vector<16x128xf32>
    %326 = arith.addf %274, %325 : vector<16x128xf32>
    %c0_107 = arith.constant 0 : index
    %c0_108 = arith.constant 0 : index
    %327 = vector.load %arg6[%c0_107, %c0_108] : memref<16x128xf32, #tpu.memory_space<vmem>>, vector<16x128xf32>
    tpu.vector_store %arg6[%c0_107, %c0_108], %326 {strides = array<i32>} : memref<16x128xf32, #tpu.memory_space<vmem>>, vector<16x128xf32>,
    return
  }
  func.func @transform_0(%arg0: i32) -> (i32, i32) {
    %c0_i32 = arith.constant 0 : i32
    %c0_i32_0 = arith.constant 0 : i32
    %c0_i32_1 = arith.constant 0 : i32
    return %c0_i32, %c0_i32_0 : i32, i32
  }
  func.func @transform_1(%arg0: i32) -> (i32, i32) {
    %c0_i32 = arith.constant 0 : i32
    %c0_i32_0 = arith.constant 0 : i32
    %c0_i32_1 = arith.constant 0 : i32
    return %c0_i32, %c0_i32_0 : i32, i32
  }
  func.func @transform_2(%arg0: i32) -> (i32, i32) {
    %c0_i32 = arith.constant 0 : i32
    %c0_i32_0 = arith.constant 0 : i32
    %c0_i32_1 = arith.constant 0 : i32
    return %c0_i32, %c0_i32_0 : i32, i32
  }
  func.func @transform_3(%arg0: i32) -> (i32, i32) {
    %c0_i32 = arith.constant 0 : i32
    %c0_i32_0 = arith.constant 0 : i32
    %c0_i32_1 = arith.constant 0 : i32
    return %c0_i32, %c0_i32_0 : i32, i32
  }
  func.func @transform_4(%arg0: i32) -> (i32, i32) {
    %c0_i32 = arith.constant 0 : i32
    %c0_i32_0 = arith.constant 0 : i32
    %c0_i32_1 = arith.constant 0 : i32
    return %c0_i32, %c0_i32_0 : i32, i32
  }
  func.func @transform_5(%arg0: i32) -> (i32, i32) {
    %c0_i32 = arith.constant 0 : i32
    %c0_i32_0 = arith.constant 0 : i32
    %c0_i32_1 = arith.constant 0 : i32
    return %c0_i32, %c0_i32_0 : i32, i32
  }
}

</mosaic_0001>

<llo_original>
// kernel: fc_transformer_block.1
$region0: #{fc_transformer_block.1}
  #allocation0 [shape = 'u32[]', space=smem, size = 0x4, offset = 0x4, fixed_abs, tag = 'smem constant byte address 0x4 - core index']
  #allocation1 [shape = 'u32[144,128]{1,0:T(1,128)}', space=vmem, size = 0x12000, scoped, tag = 'internal scratch']
  %s0 = inlined_call_operand.vmem [shape: f32[16,128], index: 0, kind: input, shape index: {}]
  %s1 = inlined_call_operand.vmem [shape: f32[144,16], index: 1, kind: input, shape index: {}]
  %s2 = inlined_call_operand.vmem [shape: f32[32,32], index: 2, kind: input, shape index: {}]
  %s3 = inlined_call_operand.vmem [shape: f32[96,128], index: 3, kind: input, shape index: {}]
  %s4 = inlined_call_operand.vmem [shape: f32[224,1], index: 4, kind: input, shape index: {}]
  %s5 = inlined_call_operand.vmem [shape: f32[16,128], index: 5, kind: output, shape index: {}]
  %s6 = sld [smem:[#allocation0]]
  $region30: #{fc_transformer_block.1} parent=0
    _
  %s8 = ssub.s32 1, %s6
  %s9 = scalar_select 0, %s8, %s6
  // Predicated region
  $region2: #{fc_transformer_block.1} parent=0 // pred_check
    _
  $region3: #{fc_transformer_block.1} parent=0 // pred_check_branch
    %11 = sbr.rel (0) target = $region5
  $region4: #{fc_transformer_block.1} parent=0 // pred_region
    _
  $region5: #{fc_transformer_block.1} parent=0 // pred_fallthru
    _
  // Predicated region
  $region6: #{fc_transformer_block.1} parent=0 // pred_check
    _
  $region7: #{fc_transformer_block.1} parent=0 // pred_check_branch
    %13 = sbr.rel (0) target = $region9
  $region8: #{fc_transformer_block.1} parent=0 // pred_region
    _
  $region9: #{fc_transformer_block.1} parent=0 // pred_fallthru
    _
  // Predicated region
  $region10: #{fc_transformer_block.1} parent=0 // pred_check
    _
  $region11: #{fc_transformer_block.1} parent=0 // pred_check_branch
    %15 = sbr.rel (0) target = $region13
  $region12: #{fc_transformer_block.1} parent=0 // pred_region
    _
  $region13: #{fc_transformer_block.1} parent=0 // pred_fallthru
    _
  // Predicated region
  $region14: #{fc_transformer_block.1} parent=0 // pred_check
    _
  $region15: #{fc_transformer_block.1} parent=0 // pred_check_branch
    %17 = sbr.rel (0) target = $region17
  $region16: #{fc_transformer_block.1} parent=0 // pred_region
    _
  $region17: #{fc_transformer_block.1} parent=0 // pred_fallthru
    _
  // Predicated region
  $region18: #{fc_transformer_block.1} parent=0 // pred_check
    _
  $region19: #{fc_transformer_block.1} parent=0 // pred_check_branch
    %19 = sbr.rel (0) target = $region21
  $region20: #{fc_transformer_block.1} parent=0 // pred_region
    _
  $region21: #{fc_transformer_block.1} parent=0 // pred_fallthru
    _
  %v20 = vld [vmem:[%s3 + $0x50] sm:$0x1]
  %v21 = vld [vmem:[%s3 + $0x58] sm:$0x1]
  %v22 = vld [vmem:[%s0] sm:$0xff]
  %v23 = vld [vmem:[%s0 + $0x8] sm:$0xff]
  %v24 = vadd.f32 %v22, %v23
  %v25 = vrot.slane %v24, 4
  %v26 = vadd.f32 %v24, %v25
  %v27 = vrot.slane %v26, 2
  %v28 = vadd.f32 %v26, %v27
  %v29 = vrot.slane %v28, 1
  %v30 = vadd.f32 %v28, %v29
  %v31 = vmul.f32 %v22, %v22
  %v32 = vmul.f32 %v23, %v23
  %v33 = vadd.f32 %v31, %v32
  %v34 = vrot.slane %v33, 4
  %v35 = vadd.f32 %v33, %v34
  %v36 = vrot.slane %v35, 2
  %v37 = vadd.f32 %v35, %v36
  %v38 = vrot.slane %v37, 1
  %v39 = vadd.f32 %v37, %v38
  %v40 = vmul.f32 %v30, %v20
  %vm41 = vcmask 1040384
  %v42 = vsel %vm41, %v40, 0.0
  %43 = vadd.xlane.f32.xlu0 %v42
  %v44 = vpop.xlane.xlu0 %43
  %v45 = vmul.f32 %v30, %v21
  %v46 = vsel %vm41, %v45, 0.0
  %47 = vadd.xlane.f32.xlu0 %v46
  %v48 = vpop.xlane.xlu0 %47
  %v49 = vmul.f32 %v39, %v20
  %v50 = vsel %vm41, %v49, 0.0
  %51 = vadd.xlane.f32.xlu0 %v50
  %v52 = vpop.xlane.xlu0 %51
  %v53 = vmul.f32 %v39, %v21
  %v54 = vsel %vm41, %v53, 0.0
  %55 = vadd.xlane.f32.xlu0 %v54
  %v56 = vpop.xlane.xlu0 %55
  %v57 = vmul.f32 %v44, %v20
  %v58 = vmul.f32 %v48, %v21
  %v59 = vadd.f32 %v57, %v58
  %v60 = vmul.f32 %v59, 0.0009765625
  %v61 = vmul.f32 %v52, %v20
  %v62 = vmul.f32 %v56, %v21
  %v63 = vadd.f32 %v61, %v62
  %v64 = vmul.f32 %v63, 0.0009765625
  %v65 = vmul.f32 %v60, %v60
  %v66 = vsub.f32 %v64, %v65
  %v67 = vlaneseq
  %v68 = vshrl.u32 %v67, 7
  %v69 = vsub.s32 0, %v68
  %v70 = vrot.slane %v60, %v69
  %v71 = vsub.f32 %v22, %v70
  %v72 = vsub.f32 %v23, %v70
  %v73 = vadd.f32 %v66, 1e-05
  %v74 = vrsqrt.pop %v73
  %v75 = vlaneseq
  %v76 = vshrl.u32 %v75, 7
  %v77 = vsub.s32 0, %v76
  %v78 = vrot.slane %v74, %v77
  %v79 = vmul.f32 %v71, %v78
  %v80 = vmul.f32 %v72, %v78
  %v81 = vld [vmem:[%s3] sm:$0xff]
  %v82 = vld [vmem:[%s3 + $0x8] sm:$0xff]
  %v83 = vmul.f32 %v79, %v81
  %v84 = vmul.f32 %v80, %v82
  %v85 = vld [vmem:[%s3 + $0x10] sm:$0xff]
  %v86 = vld [vmem:[%s3 + $0x18] sm:$0xff]
  %v87 = vadd.f32 %v83, %v85
  %v88 = vadd.f32 %v84, %v86
  %v89 = vld [vmem:[%s1] sm:$0xff]
  %v90 = vld [vmem:[%s1 + $0x8] sm:$0xff]
  %v91 = vld [vmem:[%s1 + $0x10] sm:$0xff]
  %v92 = vld [vmem:[%s1 + $0x18] sm:$0xff]
  %v93 = vld [vmem:[%s1 + $0x20] sm:$0xff]
  %v94 = vld [vmem:[%s1 + $0x28] sm:$0xff]
  %v95 = vld [vmem:[%s1 + $0x30] sm:$0xff]
  %v96 = vld [vmem:[%s1 + $0x38] sm:$0xff]
  %v97 = vld [vmem:[%s1 + $0x40] sm:$0xff]
  %v98 = vld [vmem:[%s1 + $0x48] sm:$0xff]
  %v99 = vld [vmem:[%s1 + $0x50] sm:$0xff]
  %v100 = vld [vmem:[%s1 + $0x58] sm:$0xff]
  %v101 = vld [vmem:[%s4] sm:$0xff]
  %v102 = vld [vmem:[%s4 + $0x8] sm:$0xff]
  %v103 = vld [vmem:[%s4 + $0x10] sm:$0xff]
  %v104 = vld [vmem:[%s4 + $0x18] sm:$0xff]
  %v105 = vld [vmem:[%s4 + $0x20] sm:$0xff]
  %v106 = vld [vmem:[%s4 + $0x28] sm:$0xff]
  %v107 = vld [vmem:[%s4 + $0x30] sm:$0xff]
  %v108 = vld [vmem:[%s4 + $0x38] sm:$0xff]
  %v109 = vld [vmem:[%s4 + $0x40] sm:$0xff]
  %v110 = vld [vmem:[%s4 + $0x48] sm:$0xff]
  %v111 = vld [vmem:[%s4 + $0x50] sm:$0xff]
  %v112 = vld [vmem:[%s4 + $0x58] sm:$0xff]
  %114 = vset.pattern.permute.xlu0 0
  %115 = vperm.xlu0 %114, %v101
  %v116 = vpop.permute.xlu0 %115
  %119 = vset.pattern.permute.xlu0 0
  %120 = vperm.xlu0 %119, %v102
  %v121 = vpop.permute.xlu0 %120
  %124 = vset.pattern.permute.xlu0 0
  %125 = vperm.xlu0 %124, %v103
  %v126 = vpop.permute.xlu0 %125
  %129 = vset.pattern.permute.xlu0 0
  %130 = vperm.xlu0 %129, %v104
  %v131 = vpop.permute.xlu0 %130
  %134 = vset.pattern.permute.xlu0 0
  %135 = vperm.xlu0 %134, %v105
  %v136 = vpop.permute.xlu0 %135
  %139 = vset.pattern.permute.xlu0 0
  %140 = vperm.xlu0 %139, %v106
  %v141 = vpop.permute.xlu0 %140
  %144 = vset.pattern.permute.xlu0 0
  %145 = vperm.xlu0 %144, %v107
  %v146 = vpop.permute.xlu0 %145
  %149 = vset.pattern.permute.xlu0 0
  %150 = vperm.xlu0 %149, %v108
  %v151 = vpop.permute.xlu0 %150
  %154 = vset.pattern.permute.xlu0 0
  %155 = vperm.xlu0 %154, %v109
  %v156 = vpop.permute.xlu0 %155
  %159 = vset.pattern.permute.xlu0 0
  %160 = vperm.xlu0 %159, %v110
  %v161 = vpop.permute.xlu0 %160
  %164 = vset.pattern.permute.xlu0 0
  %165 = vperm.xlu0 %164, %v111
  %v166 = vpop.permute.xlu0 %165
  %169 = vset.pattern.permute.xlu0 0
  %170 = vperm.xlu0 %169, %v112
  %v171 = vpop.permute.xlu0 %170
  %vm173 = vcmask 130048
  %v175 = vsel %vm173, %v89, 0
  %v178 = vsel %vm173, %v90, 0
  %v181 = vsel %vm173, %v91, 0
  %v184 = vsel %vm173, %v92, 0
  %v187 = vsel %vm173, %v93, 0
  %v190 = vsel %vm173, %v94, 0
  %v193 = vsel %vm173, %v95, 0
  %v196 = vsel %vm173, %v96, 0
  %v199 = vsel %vm173, %v97, 0
  %v202 = vsel %vm173, %v98, 0
  %v205 = vsel %vm173, %v99, 0
  %v208 = vsel %vm173, %v100, 0
  %210 = vmatprep.subr.mxu0 0.0
  %211 = vmatpush1.msra.mxu0 0.0
  %212 = vmatprep.subr.mxu0 0.0
  %213 = vmatpush1.msra.mxu0 0.0
  %214 = vmatprep.subr.mxu0 0.0
  %215 = vmatpush1.msra.mxu0 0.0
  %216 = vmatprep.subr.mxu0 0.0
  %217 = vmatpush1.msra.mxu0 0.0
  %218 = vmatprep.subr.mxu0 0.0
  %219 = vmatpush1.msra.mxu0 0.0
  %220 = vmatprep.subr.mxu0 0.0
  %221 = vmatpush1.msra.mxu0 0.0
  %222 = vmatprep.subr.mxu0 0.0
  %223 = vmatpush1.msra.mxu0 0.0
  %224 = vmatprep.subr.mxu0 0.0
  %225 = vmatpush1.msra.mxu0 0.0
  %226 = vmatprep.subr.mxu0 0.0
  %227 = vmatpush1.msra.mxu0 0.0
  %228 = vmatprep.subr.mxu0 0.0
  %229 = vmatpush1.msra.mxu0 0.0
  %230 = vmatprep.subr.mxu0 0.0
  %231 = vmatpush1.msra.mxu0 0.0
  %232 = vmatprep.subr.mxu0 0.0
  %233 = vmatpush1.msra.mxu0 0.0
  %234 = vmatprep.subr.mxu0 0.0
  %235 = vmatpush1.msra.mxu0 0.0
  %236 = vmatprep.subr.mxu0 0.0
  %237 = vmatpush1.msra.mxu0 0.0
  %238 = vmatprep.subr.mxu0 0.0
  %239 = vmatpush1.msra.mxu0 %v88
  %240 = vmatprep.subr.mxu0 0.0
  %241 = vmatpush1.msra.mxu0 %v87
  %242 = vmatprep.subr.mxu0 0.0
  %243 = vmatpush2.msra.mxu0 0.0
  %244 = vmatprep.subr.mxu0 0.0
  %245 = vmatpush2.msra.mxu0 0.0
  %246 = vmatprep.subr.mxu0 0.0
  %247 = vmatpush2.msra.mxu0 0.0
  %248 = vmatprep.subr.mxu0 0.0
  %249 = vmatpush2.msra.mxu0 0.0
  %250 = vmatprep.subr.mxu0 0.0
  %251 = vmatpush2.msra.mxu0 0.0
  %252 = vmatprep.subr.mxu0 0.0
  %253 = vmatpush2.msra.mxu0 0.0
  %254 = vmatprep.subr.mxu0 0.0
  %255 = vmatpush2.msra.mxu0 0.0
  %256 = vmatprep.subr.mxu0 0.0
  %257 = vmatpush2.msra.mxu0 0.0
  %258 = vmatprep.subr.mxu0 0.0
  %259 = vmatpush2.msra.mxu0 0.0
  %260 = vmatprep.subr.mxu0 0.0
  %261 = vmatpush2.msra.mxu0 0.0
  %262 = vmatprep.subr.mxu0 0.0
  %263 = vmatpush2.msra.mxu0 0.0
  %264 = vmatprep.subr.mxu0 0.0
  %265 = vmatpush2.msra.mxu0 0.0
  %266 = vmatprep.subr.mxu0 0.0
  %267 = vmatpush2.msra.mxu0 0.0
  %268 = vmatprep.subr.mxu0 0.0
  %269 = vmatpush2.msra.mxu0 0.0
  %270 = vmatprep.subr.mxu0 0.0
  %271 = vmatpush2.msra.mxu0 0.0
  %272 = vmatprep.subr.mxu0 0.0
  %273 = vmatpush2.msra.mxu0 0.0
  %274 = vmatprep.mubr.f32.mxu0 0.0
  %275 = vmatmul.mubr.f32.gmra.mxu0 %v175
  %v276 = vpop.f32.mrf.mxu0
  %v277 = vadd.f32 %v116, %v276
  %v278 = vpop.f32.mrf.mxu0
  %279 = vmatprep.mubr.f32.mxu0 0.0
  %280 = vmatmul.mubr.f32.gmra.mxu0 %v178
  %v281 = vpop.f32.mrf.mxu0
  %v282 = vadd.f32 %v121, %v281
  %v283 = vpop.f32.mrf.mxu0
  %284 = vmatprep.mubr.f32.mxu0 0.0
  %285 = vmatmul.mubr.f32.gmra.mxu0 %v181
  %v286 = vpop.f32.mrf.mxu0
  %v287 = vadd.f32 %v126, %v286
  %v288 = vpop.f32.mrf.mxu0
  %289 = vmatprep.mubr.f32.mxu0 0.0
  %290 = vmatmul.mubr.f32.gmra.mxu0 %v184
  %v291 = vpop.f32.mrf.mxu0
  %v292 = vadd.f32 %v131, %v291
  %v293 = vpop.f32.mrf.mxu0
  %294 = vmatprep.mubr.f32.mxu0 0.0
  %295 = vmatmul.mubr.f32.gmra.mxu0 %v187
  %v296 = vpop.f32.mrf.mxu0
  %v297 = vadd.f32 %v136, %v296
  %v298 = vpop.f32.mrf.mxu0
  %299 = vmatprep.mubr.f32.mxu0 0.0
  %300 = vmatmul.mubr.f32.gmra.mxu0 %v190
  %v301 = vpop.f32.mrf.mxu0
  %v302 = vadd.f32 %v141, %v301
  %v303 = vpop.f32.mrf.mxu0
  %304 = vmatprep.mubr.f32.mxu0 0.0
  %305 = vmatmul.mubr.f32.gmra.mxu0 %v193
  %v306 = vpop.f32.mrf.mxu0
  %v307 = vadd.f32 %v146, %v306
  %v308 = vpop.f32.mrf.mxu0
  %309 = vmatprep.mubr.f32.mxu0 0.0
  %310 = vmatmul.mubr.f32.gmra.mxu0 %v196
  %v311 = vpop.f32.mrf.mxu0
  %v312 = vadd.f32 %v151, %v311
  %v313 = vpop.f32.mrf.mxu0
  %314 = vmatprep.mubr.f32.mxu0 0.0
  %315 = vmatmul.mubr.f32.gmra.mxu0 %v199
  %v316 = vpop.f32.mrf.mxu0
  %v317 = vadd.f32 %v156, %v316
  %v318 = vpop.f32.mrf.mxu0
  %319 = vmatprep.mubr.f32.mxu0 0.0
  %320 = vmatmul.mubr.f32.gmra.mxu0 %v202
  %v321 = vpop.f32.mrf.mxu0
  %v322 = vadd.f32 %v161, %v321
  %v323 = vpop.f32.mrf.mxu0
  %324 = vmatprep.mubr.f32.mxu0 0.0
  %325 = vmatmul.mubr.f32.gmra.mxu0 %v205
  %v326 = vpop.f32.mrf.mxu0
  %v327 = vadd.f32 %v166, %v326
  %v328 = vpop.f32.mrf.mxu0
  %329 = vmatprep.mubr.f32.mxu0 0.0
  %330 = vmatmul.mubr.f32.gmra.mxu0 %v208
  %v331 = vpop.f32.mrf.mxu0
  %v332 = vadd.f32 %v171, %v331
  %v333 = vpop.f32.mrf.mxu0
  %334 = vdwg.mxu0
  %v335 = vmax.f32 %v277, 0.0
  %v336 = vmax.f32 %v282, 0.0
  %v337 = vmax.f32 %v287, 0.0
  %v338 = vmax.f32 %v292, 0.0
  %v339 = vmul.f32 %v335, %v335
  %v340 = vmul.f32 %v336, %v336
  %v341 = vmul.f32 %v337, %v337
  %v342 = vmul.f32 %v338, %v338
  %v343 = vmax.f32 %v297, 0.0
  %v344 = vmax.f32 %v302, 0.0
  %v345 = vmax.f32 %v307, 0.0
  %v346 = vmax.f32 %v312, 0.0
  %v347 = vmul.f32 %v343, %v343
  %v348 = vmul.f32 %v344, %v344
  %v349 = vmul.f32 %v345, %v345
  %v350 = vmul.f32 %v346, %v346
  %351 = vadd.xlane.f32.xlu0 %v339
  %v352 = vpop.xlane.xlu0 %351
  %353 = vadd.xlane.f32.xlu0 %v340
  %v354 = vpop.xlane.xlu0 %353
  %355 = vadd.xlane.f32.xlu0 %v341
  %v356 = vpop.xlane.xlu0 %355
  %357 = vadd.xlane.f32.xlu0 %v342
  %v358 = vpop.xlane.xlu0 %357
  %v359 = vadd.f32 %v352, %v354
  %v360 = vadd.f32 %v359, %v356
  %v361 = vadd.f32 %v360, %v358
  %v362 = vrot.slane %v361, 4
  %v363 = vadd.f32 %v361, %v362
  %v364 = vrot.slane %v363, 2
  %v365 = vadd.f32 %v363, %v364
  %v366 = vrot.slane %v365, 1
  %v367 = vadd.f32 %v365, %v366
  %v368 = vmul.f32 %v339, %v339
  %v369 = vmul.f32 %v340, %v340
  %v370 = vmul.f32 %v341, %v341
  %v371 = vmul.f32 %v342, %v342
  %372 = vadd.xlane.f32.xlu0 %v368
  %v373 = vpop.xlane.xlu0 %372
  %374 = vadd.xlane.f32.xlu0 %v369
  %v375 = vpop.xlane.xlu0 %374
  %376 = vadd.xlane.f32.xlu0 %v370
  %v377 = vpop.xlane.xlu0 %376
  %378 = vadd.xlane.f32.xlu0 %v371
  %v379 = vpop.xlane.xlu0 %378
  %v380 = vadd.f32 %v373, %v375
  %v381 = vadd.f32 %v380, %v377
  %v382 = vadd.f32 %v381, %v379
  %v383 = vrot.slane %v382, 4
  %v384 = vadd.f32 %v382, %v383
  %v385 = vrot.slane %v384, 2
  %v386 = vadd.f32 %v384, %v385
  %v387 = vrot.slane %v386, 1
  %v388 = vadd.f32 %v386, %v387
  %389 = vadd.xlane.f32.xlu0 %v347
  %v390 = vpop.xlane.xlu0 %389
  %391 = vadd.xlane.f32.xlu0 %v348
  %v392 = vpop.xlane.xlu0 %391
  %393 = vadd.xlane.f32.xlu0 %v349
  %v394 = vpop.xlane.xlu0 %393
  %395 = vadd.xlane.f32.xlu0 %v350
  %v396 = vpop.xlane.xlu0 %395
  %v397 = vadd.f32 %v390, %v392
  %v398 = vadd.f32 %v397, %v394
  %v399 = vadd.f32 %v398, %v396
  %v400 = vrot.slane %v399, 4
  %v401 = vadd.f32 %v399, %v400
  %v402 = vrot.slane %v401, 2
  %v403 = vadd.f32 %v401, %v402
  %v404 = vrot.slane %v403, 1
  %v405 = vadd.f32 %v403, %v404
  %v406 = vmul.f32 %v347, %v347
  %v407 = vmul.f32 %v348, %v348
  %v408 = vmul.f32 %v349, %v349
  %v409 = vmul.f32 %v350, %v350
  %410 = vadd.xlane.f32.xlu0 %v406
  %v411 = vpop.xlane.xlu0 %410
  %412 = vadd.xlane.f32.xlu0 %v407
  %v413 = vpop.xlane.xlu0 %412
  %414 = vadd.xlane.f32.xlu0 %v408
  %v415 = vpop.xlane.xlu0 %414
  %416 = vadd.xlane.f32.xlu0 %v409
  %v417 = vpop.xlane.xlu0 %416
  %v418 = vadd.f32 %v411, %v413
  %v419 = vadd.f32 %v418, %v415
  %v420 = vadd.f32 %v419, %v417
  %v421 = vrot.slane %v420, 4
  %v422 = vadd.f32 %v420, %v421
  %v423 = vrot.slane %v422, 2
  %v424 = vadd.f32 %v422, %v423
  %v425 = vrot.slane %v424, 1
  %v426 = vadd.f32 %v424, %v425
  %v427 = vrsqrt.pop %v367
  %v428 = vmul.f32 %v367, %v427
  %vm429 = vcmp.eq.f32.partialorder %v367, inf
  %v430 = vsel %vm429, %v367, %v428
  %vm431 = vcmp.eq.f32.partialorder %v367, 0.0
  %v432 = vand.u32 %v367, 2147483648
  %v433 = vsel %vm431, %v432, %v430
  %v434 = vrsqrt.pop %v388
  %v435 = vmul.f32 %v433, %v434
  %v436 = vmul.f32 %v435, %v339
  %v437 = vmul.f32 %v435, %v340
  %v438 = vmul.f32 %v435, %v341
  %v439 = vmul.f32 %v435, %v342
  %v440 = vrsqrt.pop %v405
  %v441 = vmul.f32 %v405, %v440
  %vm442 = vcmp.eq.f32.partialorder %v405, inf
  %v443 = vsel %vm442, %v405, %v441
  %vm444 = vcmp.eq.f32.partialorder %v405, 0.0
  %v445 = vand.u32 %v405, 2147483648
  %v446 = vsel %vm444, %v445, %v443
  %v447 = vrsqrt.pop %v426
  %v448 = vmul.f32 %v446, %v447
  %v449 = vmul.f32 %v448, %v347
  %v450 = vmul.f32 %v448, %v348
  %v451 = vmul.f32 %v448, %v349
  %v452 = vmul.f32 %v448, %v350
  %v453 = vld [vmem:[%s2 + $0x10] sm:$0xff]
  %v454 = vld [vmem:[%s2 + $0x18] sm:$0xff]
  %v455 = vld [vmem:[%s3 + $0x40] sm:$0x1]
  %v456 = vlaneseq
  %v457 = vshrl.u32 %v456, 7
  %v458 = vsub.s32 0, %v457
  %v459 = vrot.slane %v455, %v458
  %v460 = vmul.f32 %v317, %v459
  %v461 = vmul.f32 %v322, %v459
  %462 = vmatprep.subr.mxu0 0.0
  %463 = vmatpush1.xpose.msra.mxu0 0.0
  %464 = vmatprep.subr.mxu0 0.0
  %465 = vmatpush1.xpose.msra.mxu0 0.0
  %466 = vmatprep.subr.mxu0 0.0
  %467 = vmatpush1.xpose.msra.mxu0 0.0
  %468 = vmatprep.subr.mxu0 0.0
  %469 = vmatpush1.xpose.msra.mxu0 0.0
  %470 = vmatprep.subr.mxu0 0.0
  %471 = vmatpush1.xpose.msra.mxu0 0.0
  %472 = vmatprep.subr.mxu0 0.0
  %473 = vmatpush1.xpose.msra.mxu0 0.0
  %474 = vmatprep.subr.mxu0 0.0
  %475 = vmatpush1.xpose.msra.mxu0 0.0
  %476 = vmatprep.subr.mxu0 0.0
  %477 = vmatpush1.xpose.msra.mxu0 0.0
  %478 = vmatprep.subr.mxu0 0.0
  %479 = vmatpush1.xpose.msra.mxu0 0.0
  %480 = vmatprep.subr.mxu0 0.0
  %481 = vmatpush1.xpose.msra.mxu0 0.0
  %482 = vmatprep.subr.mxu0 0.0
  %483 = vmatpush1.xpose.msra.mxu0 0.0
  %484 = vmatprep.subr.mxu0 0.0
  %485 = vmatpush1.xpose.msra.mxu0 0.0
  %486 = vmatprep.subr.mxu0 0.0
  %487 = vmatpush1.xpose.msra.mxu0 %v452
  %488 = vmatprep.subr.mxu0 0.0
  %489 = vmatpush1.xpose.msra.mxu0 %v451
  %490 = vmatprep.subr.mxu0 0.0
  %491 = vmatpush1.xpose.msra.mxu0 %v450
  %492 = vmatprep.subr.mxu0 0.0
  %493 = vmatpush1.xpose.msra.mxu0 %v449
  %494 = vmatprep.subr.mxu0 0.0
  %495 = vmatpush2.xpose.msra.mxu0 0.0
  %496 = vmatprep.subr.mxu0 0.0
  %497 = vmatpush2.xpose.msra.mxu0 0.0
  %498 = vmatprep.subr.mxu0 0.0
  %499 = vmatpush2.xpose.msra.mxu0 0.0
  %500 = vmatprep.subr.mxu0 0.0
  %501 = vmatpush2.xpose.msra.mxu0 0.0
  %502 = vmatprep.subr.mxu0 0.0
  %503 = vmatpush2.xpose.msra.mxu0 0.0
  %504 = vmatprep.subr.mxu0 0.0
  %505 = vmatpush2.xpose.msra.mxu0 0.0
  %506 = vmatprep.subr.mxu0 0.0
  %507 = vmatpush2.xpose.msra.mxu0 0.0
  %508 = vmatprep.subr.mxu0 0.0
  %509 = vmatpush2.xpose.msra.mxu0 0.0
  %510 = vmatprep.subr.mxu0 0.0
  %511 = vmatpush2.xpose.msra.mxu0 0.0
  %512 = vmatprep.subr.mxu0 0.0
  %513 = vmatpush2.xpose.msra.mxu0 0.0
  %514 = vmatprep.subr.mxu0 0.0
  %515 = vmatpush2.xpose.msra.mxu0 0.0
  %516 = vmatprep.subr.mxu0 0.0
  %517 = vmatpush2.xpose.msra.mxu0 0.0
  %518 = vmatprep.subr.mxu0 0.0
  %519 = vmatpush2.xpose.msra.mxu0 0.0
  %520 = vmatprep.subr.mxu0 0.0
  %521 = vmatpush2.xpose.msra.mxu0 0.0
  %522 = vmatprep.subr.mxu0 0.0
  %523 = vmatpush2.xpose.msra.mxu0 0.0
  %524 = vmatprep.subr.mxu0 0.0
  %525 = vmatpush2.xpose.msra.mxu0 0.0
  %526 = vmatprep.mubr.f32.mxu0 0.0
  %527 = vmatmul.mubr.f32.gmra.mxu0 %v460
  %v528 = vpop.f32.mrf.mxu0
  %v529 = vadd.f32 0.0, %v528
  %v530 = vpop.f32.mrf.mxu0
  %531 = vmatprep.mubr.f32.mxu0 0.0
  %532 = vmatmul.mubr.f32.gmra.mxu0 %v461
  %v533 = vpop.f32.mrf.mxu0
  %v534 = vadd.f32 0.0, %v533
  %v535 = vpop.f32.mrf.mxu0
  %536 = vdwg.mxu0
  %v537 = vmax.f32 %v529, -32.0
  %v538 = vmax.f32 %v534, -32.0
  %v539 = vmin.f32 %v537, 32.0
  %v540 = vmin.f32 %v538, 32.0
  %v541 = vmul.f32 %v539, %v453
  %v542 = vmul.f32 %v540, %v454
  %v543 = vld [vmem:[%s3 + $0x48] sm:$0x1]
  %v544 = vlaneseq
  %v545 = vshrl.u32 %v544, 7
  %v546 = vsub.s32 0, %v545
  %v547 = vrot.slane %v543, %v546
  %v548 = vmul.f32 %v317, %v547
  %v549 = vmul.f32 %v322, %v547
  %550 = vmatprep.subr.mxu0 0.0
  %551 = vmatpush1.xpose.msra.mxu0 0.0
  %552 = vmatprep.subr.mxu0 0.0
  %553 = vmatpush1.xpose.msra.mxu0 0.0
  %554 = vmatprep.subr.mxu0 0.0
  %555 = vmatpush1.xpose.msra.mxu0 0.0
  %556 = vmatprep.subr.mxu0 0.0
  %557 = vmatpush1.xpose.msra.mxu0 0.0
  %558 = vmatprep.subr.mxu0 0.0
  %559 = vmatpush1.xpose.msra.mxu0 0.0
  %560 = vmatprep.subr.mxu0 0.0
  %561 = vmatpush1.xpose.msra.mxu0 0.0
  %562 = vmatprep.subr.mxu0 0.0
  %563 = vmatpush1.xpose.msra.mxu0 0.0
  %564 = vmatprep.subr.mxu0 0.0
  %565 = vmatpush1.xpose.msra.mxu0 0.0
  %566 = vmatprep.subr.mxu0 0.0
  %567 = vmatpush1.xpose.msra.mxu0 0.0
  %568 = vmatprep.subr.mxu0 0.0
  %569 = vmatpush1.xpose.msra.mxu0 0.0
  %570 = vmatprep.subr.mxu0 0.0
  %571 = vmatpush1.xpose.msra.mxu0 0.0
  %572 = vmatprep.subr.mxu0 0.0
  %573 = vmatpush1.xpose.msra.mxu0 0.0
  %574 = vmatprep.subr.mxu0 0.0
  %575 = vmatpush1.xpose.msra.mxu0 %v452
  %576 = vmatprep.subr.mxu0 0.0
  %577 = vmatpush1.xpose.msra.mxu0 %v451
  %578 = vmatprep.subr.mxu0 0.0
  %579 = vmatpush1.xpose.msra.mxu0 %v450
  %580 = vmatprep.subr.mxu0 0.0
  %581 = vmatpush1.xpose.msra.mxu0 %v449
  %582 = vmatprep.subr.mxu0 0.0
  %583 = vmatpush2.xpose.msra.mxu0 0.0
  %584 = vmatprep.subr.mxu0 0.0
  %585 = vmatpush2.xpose.msra.mxu0 0.0
  %586 = vmatprep.subr.mxu0 0.0
  %587 = vmatpush2.xpose.msra.mxu0 0.0
  %588 = vmatprep.subr.mxu0 0.0
  %589 = vmatpush2.xpose.msra.mxu0 0.0
  %590 = vmatprep.subr.mxu0 0.0
  %591 = vmatpush2.xpose.msra.mxu0 0.0
  %592 = vmatprep.subr.mxu0 0.0
  %593 = vmatpush2.xpose.msra.mxu0 0.0
  %594 = vmatprep.subr.mxu0 0.0
  %595 = vmatpush2.xpose.msra.mxu0 0.0
  %596 = vmatprep.subr.mxu0 0.0
  %597 = vmatpush2.xpose.msra.mxu0 0.0
  %598 = vmatprep.subr.mxu0 0.0
  %599 = vmatpush2.xpose.msra.mxu0 0.0
  %600 = vmatprep.subr.mxu0 0.0
  %601 = vmatpush2.xpose.msra.mxu0 0.0
  %602 = vmatprep.subr.mxu0 0.0
  %603 = vmatpush2.xpose.msra.mxu0 0.0
  %604 = vmatprep.subr.mxu0 0.0
  %605 = vmatpush2.xpose.msra.mxu0 0.0
  %606 = vmatprep.subr.mxu0 0.0
  %607 = vmatpush2.xpose.msra.mxu0 0.0
  %608 = vmatprep.subr.mxu0 0.0
  %609 = vmatpush2.xpose.msra.mxu0 0.0
  %610 = vmatprep.subr.mxu0 0.0
  %611 = vmatpush2.xpose.msra.mxu0 0.0
  %612 = vmatprep.subr.mxu0 0.0
  %613 = vmatpush2.xpose.msra.mxu0 0.0
  %614 = vmatprep.mubr.f32.mxu0 0.0
  %615 = vmatmul.mubr.f32.gmra.mxu0 %v548
  %v616 = vpop.f32.mrf.mxu0
  %v617 = vadd.f32 0.0, %v616
  %v618 = vpop.f32.mrf.mxu0
  %619 = vmatprep.mubr.f32.mxu0 0.0
  %620 = vmatmul.mubr.f32.gmra.mxu0 %v549
  %v621 = vpop.f32.mrf.mxu0
  %v622 = vadd.f32 0.0, %v621
  %v623 = vpop.f32.mrf.mxu0
  %624 = vdwg.mxu0
  %v625 = vmax.f32 %v617, -32.0
  %v626 = vmax.f32 %v622, -32.0
  %v627 = vmin.f32 %v625, 32.0
  %v628 = vmin.f32 %v626, 32.0
  %v629 = vmul.f32 %v627, %v453
  %v630 = vmul.f32 %v628, %v454
  %v631 = vld [vmem:[%s4 + $0x90] sm:$0xff]
  %v632 = vld [vmem:[%s4 + $0x98] sm:$0xff]
  %v633 = vld [vmem:[%s4 + $0xa0] sm:$0xff]
  %v634 = vld [vmem:[%s4 + $0xa8] sm:$0xff]
  %v635 = vlaneseq
  %v636 = vshrl.u32 %v635, 7
  %v637 = vsub.s32 0, %v636
  %v638 = vrot.slane %v20, %v637
  %v639 = vmul.f32 %v327, %v638
  %v640 = vmul.f32 %v332, %v638
  %641 = vadd.xlane.f32.xlu0 %v639
  %v642 = vpop.xlane.xlu0 %641
  %643 = vadd.xlane.f32.xlu0 %v640
  %v644 = vpop.xlane.xlu0 %643
  %v645 = vmul.f32 %v642, 0.015625
  %v646 = vmul.f32 %v644, 0.015625
  %v647 = vadd.f32 %v645, %v646
  %v648 = vrot.slane %v647, 4
  %v649 = vadd.f32 %v647, %v648
  %v650 = vrot.slane %v649, 2
  %v651 = vadd.f32 %v649, %v650
  %v652 = vrot.slane %v651, 1
  %v653 = vadd.f32 %v651, %v652
  %v654 = vrcp.pop 16.0
  %v655 = vmul.f32 %v653, %v654
  %v656 = vmul.f32 %v645, %v645
  %v657 = vmul.f32 %v646, %v646
  %v658 = vadd.f32 %v656, %v657
  %v659 = vrot.slane %v658, 4
  %v660 = vadd.f32 %v658, %v659
  %v661 = vrot.slane %v660, 2
  %v662 = vadd.f32 %v660, %v661
  %v663 = vrot.slane %v662, 1
  %v664 = vadd.f32 %v662, %v663
  %v665 = vmul.f32 %v664, %v654
  %v666 = vmul.f32 %v655, %v655
  %v667 = vsub.f32 %v665, %v666
  %v668 = vsub.f32 %v645, %v655
  %v669 = vsub.f32 %v646, %v655
  %v670 = vadd.f32 %v667, 1e-05
  %v671 = vrsqrt.pop %v670
  %v672 = vmul.f32 %v668, %v671
  %v673 = vmul.f32 %v669, %v671
  %v674 = vmul.f32 %v672, %v631
  %v675 = vmul.f32 %v673, %v632
  %v676 = vadd.f32 %v674, %v633
  %v677 = vadd.f32 %v675, %v634
  %679 = vset.pattern.permute.xlu0 0
  %680 = vperm.xlu0 %679, %v676
  %v681 = vpop.permute.xlu0 %680
  %684 = vset.pattern.permute.xlu0 0
  %685 = vperm.xlu0 %684, %v677
  %v686 = vpop.permute.xlu0 %685
  %v688 = vmul.f32 %v681, %v638
  %v689 = vmul.f32 %v686, %v638
  %v690 = vlaneseq
  %v691 = vshrl.u32 %v690, 7
  %v692 = vsub.s32 0, %v691
  %v693 = vrot.slane %v21, %v692
  %v694 = vmul.f32 %v327, %v693
  %v695 = vmul.f32 %v332, %v693
  %696 = vadd.xlane.f32.xlu0 %v694
  %v697 = vpop.xlane.xlu0 %696
  %698 = vadd.xlane.f32.xlu0 %v695
  %v699 = vpop.xlane.xlu0 %698
  %v700 = vmul.f32 %v697, 0.015625
  %v701 = vmul.f32 %v699, 0.015625
  %v702 = vadd.f32 %v700, %v701
  %v703 = vrot.slane %v702, 4
  %v704 = vadd.f32 %v702, %v703
  %v705 = vrot.slane %v704, 2
  %v706 = vadd.f32 %v704, %v705
  %v707 = vrot.slane %v706, 1
  %v708 = vadd.f32 %v706, %v707
  %v709 = vmul.f32 %v708, %v654
  %v710 = vmul.f32 %v700, %v700
  %v711 = vmul.f32 %v701, %v701
  %v712 = vadd.f32 %v710, %v711
  %v713 = vrot.slane %v712, 4
  %v714 = vadd.f32 %v712, %v713
  %v715 = vrot.slane %v714, 2
  %v716 = vadd.f32 %v714, %v715
  %v717 = vrot.slane %v716, 1
  %v718 = vadd.f32 %v716, %v717
  %v719 = vmul.f32 %v718, %v654
  %v720 = vmul.f32 %v709, %v709
  %v721 = vsub.f32 %v719, %v720
  %v722 = vsub.f32 %v700, %v709
  %v723 = vsub.f32 %v701, %v709
  %v724 = vadd.f32 %v721, 1e-05
  %v725 = vrsqrt.pop %v724
  %v726 = vmul.f32 %v722, %v725
  %v727 = vmul.f32 %v723, %v725
  %v728 = vmul.f32 %v726, %v631
  %v729 = vmul.f32 %v727, %v632
  %v730 = vadd.f32 %v728, %v633
  %v731 = vadd.f32 %v729, %v634
  %733 = vset.pattern.permute.xlu0 0
  %734 = vperm.xlu0 %733, %v730
  %v735 = vpop.permute.xlu0 %734
  %738 = vset.pattern.permute.xlu0 0
  %739 = vperm.xlu0 %738, %v731
  %v740 = vpop.permute.xlu0 %739
  %v742 = vmul.f32 %v735, %v693
  %v743 = vmul.f32 %v740, %v693
  %v744 = vadd.f32 %v688, %v742
  %v745 = vadd.f32 %v689, %v743
  %vm746 = vcmask 261120
  %v748 = vsel %vm746, %v541, 0
  %v751 = vsel %vm746, %v542, 0
  %753 = vmatprep.subr.mxu0 0.0
  %754 = vmatpush1.msra.mxu0 0.0
  %755 = vmatprep.subr.mxu0 0.0
  %756 = vmatpush1.msra.mxu0 0.0
  %757 = vmatprep.subr.mxu0 0.0
  %758 = vmatpush1.msra.mxu0 0.0
  %759 = vmatprep.subr.mxu0 0.0
  %760 = vmatpush1.msra.mxu0 0.0
  %761 = vmatprep.subr.mxu0 0.0
  %762 = vmatpush1.msra.mxu0 0.0
  %763 = vmatprep.subr.mxu0 0.0
  %764 = vmatpush1.msra.mxu0 0.0
  %765 = vmatprep.subr.mxu0 0.0
  %766 = vmatpush1.msra.mxu0 0.0
  %767 = vmatprep.subr.mxu0 0.0
  %768 = vmatpush1.msra.mxu0 0.0
  %769 = vmatprep.subr.mxu0 0.0
  %770 = vmatpush1.msra.mxu0 0.0
  %771 = vmatprep.subr.mxu0 0.0
  %772 = vmatpush1.msra.mxu0 0.0
  %773 = vmatprep.subr.mxu0 0.0
  %774 = vmatpush1.msra.mxu0 0.0
  %775 = vmatprep.subr.mxu0 0.0
  %776 = vmatpush1.msra.mxu0 0.0
  %777 = vmatprep.subr.mxu0 0.0
  %778 = vmatpush1.msra.mxu0 %v439
  %779 = vmatprep.subr.mxu0 0.0
  %780 = vmatpush1.msra.mxu0 %v438
  %781 = vmatprep.subr.mxu0 0.0
  %782 = vmatpush1.msra.mxu0 %v437
  %783 = vmatprep.subr.mxu0 0.0
  %784 = vmatpush1.msra.mxu0 %v436
  %785 = vmatprep.subr.mxu0 0.0
  %786 = vmatpush2.msra.mxu0 0.0
  %787 = vmatprep.subr.mxu0 0.0
  %788 = vmatpush2.msra.mxu0 0.0
  %789 = vmatprep.subr.mxu0 0.0
  %790 = vmatpush2.msra.mxu0 0.0
  %791 = vmatprep.subr.mxu0 0.0
  %792 = vmatpush2.msra.mxu0 0.0
  %793 = vmatprep.subr.mxu0 0.0
  %794 = vmatpush2.msra.mxu0 0.0
  %795 = vmatprep.subr.mxu0 0.0
  %796 = vmatpush2.msra.mxu0 0.0
  %797 = vmatprep.subr.mxu0 0.0
  %798 = vmatpush2.msra.mxu0 0.0
  %799 = vmatprep.subr.mxu0 0.0
  %800 = vmatpush2.msra.mxu0 0.0
  %801 = vmatprep.subr.mxu0 0.0
  %802 = vmatpush2.msra.mxu0 0.0
  %803 = vmatprep.subr.mxu0 0.0
  %804 = vmatpush2.msra.mxu0 0.0
  %805 = vmatprep.subr.mxu0 0.0
  %806 = vmatpush2.msra.mxu0 0.0
  %807 = vmatprep.subr.mxu0 0.0
  %808 = vmatpush2.msra.mxu0 0.0
  %809 = vmatprep.subr.mxu0 0.0
  %810 = vmatpush2.msra.mxu0 0.0
  %811 = vmatprep.subr.mxu0 0.0
  %812 = vmatpush2.msra.mxu0 0.0
  %813 = vmatprep.subr.mxu0 0.0
  %814 = vmatpush2.msra.mxu0 0.0
  %815 = vmatprep.subr.mxu0 0.0
  %816 = vmatpush2.msra.mxu0 0.0
  %817 = vmatprep.mubr.f32.mxu0 0.0
  %818 = vmatmul.mubr.f32.gmra.mxu0 %v748
  %v819 = vpop.f32.mrf.mxu0
  %v820 = vadd.f32 0.0, %v819
  %v821 = vpop.f32.mrf.mxu0
  %822 = vmatprep.mubr.f32.mxu0 0.0
  %823 = vmatmul.mubr.f32.gmra.mxu0 %v751
  %v824 = vpop.f32.mrf.mxu0
  %v825 = vadd.f32 0.0, %v824
  %v826 = vpop.f32.mrf.mxu0
  %827 = vdwg.mxu0
  %v828 = vmul.f32 %v820, %v638
  %v829 = vmul.f32 %v825, %v638
  %v831 = vsel %vm746, %v629, 0
  %v834 = vsel %vm746, %v630, 0
  %836 = vmatprep.subr.mxu0 0.0
  %837 = vmatpush1.msra.mxu0 0.0
  %838 = vmatprep.subr.mxu0 0.0
  %839 = vmatpush1.msra.mxu0 0.0
  %840 = vmatprep.subr.mxu0 0.0
  %841 = vmatpush1.msra.mxu0 0.0
  %842 = vmatprep.subr.mxu0 0.0
  %843 = vmatpush1.msra.mxu0 0.0
  %844 = vmatprep.subr.mxu0 0.0
  %845 = vmatpush1.msra.mxu0 0.0
  %846 = vmatprep.subr.mxu0 0.0
  %847 = vmatpush1.msra.mxu0 0.0
  %848 = vmatprep.subr.mxu0 0.0
  %849 = vmatpush1.msra.mxu0 0.0
  %850 = vmatprep.subr.mxu0 0.0
  %851 = vmatpush1.msra.mxu0 0.0
  %852 = vmatprep.subr.mxu0 0.0
  %853 = vmatpush1.msra.mxu0 0.0
  %854 = vmatprep.subr.mxu0 0.0
  %855 = vmatpush1.msra.mxu0 0.0
  %856 = vmatprep.subr.mxu0 0.0
  %857 = vmatpush1.msra.mxu0 0.0
  %858 = vmatprep.subr.mxu0 0.0
  %859 = vmatpush1.msra.mxu0 0.0
  %860 = vmatprep.subr.mxu0 0.0
  %861 = vmatpush1.msra.mxu0 %v439
  %862 = vmatprep.subr.mxu0 0.0
  %863 = vmatpush1.msra.mxu0 %v438
  %864 = vmatprep.subr.mxu0 0.0
  %865 = vmatpush1.msra.mxu0 %v437
  %866 = vmatprep.subr.mxu0 0.0
  %867 = vmatpush1.msra.mxu0 %v436
  %868 = vmatprep.subr.mxu0 0.0
  %869 = vmatpush2.msra.mxu0 0.0
  %870 = vmatprep.subr.mxu0 0.0
  %871 = vmatpush2.msra.mxu0 0.0
  %872 = vmatprep.subr.mxu0 0.0
  %873 = vmatpush2.msra.mxu0 0.0
  %874 = vmatprep.subr.mxu0 0.0
  %875 = vmatpush2.msra.mxu0 0.0
  %876 = vmatprep.subr.mxu0 0.0
  %877 = vmatpush2.msra.mxu0 0.0
  %878 = vmatprep.subr.mxu0 0.0
  %879 = vmatpush2.msra.mxu0 0.0
  %880 = vmatprep.subr.mxu0 0.0
  %881 = vmatpush2.msra.mxu0 0.0
  %882 = vmatprep.subr.mxu0 0.0
  %883 = vmatpush2.msra.mxu0 0.0
  %884 = vmatprep.subr.mxu0 0.0
  %885 = vmatpush2.msra.mxu0 0.0
  %886 = vmatprep.subr.mxu0 0.0
  %887 = vmatpush2.msra.mxu0 0.0
  %888 = vmatprep.subr.mxu0 0.0
  %889 = vmatpush2.msra.mxu0 0.0
  %890 = vmatprep.subr.mxu0 0.0
  %891 = vmatpush2.msra.mxu0 0.0
  %892 = vmatprep.subr.mxu0 0.0
  %893 = vmatpush2.msra.mxu0 0.0
  %894 = vmatprep.subr.mxu0 0.0
  %895 = vmatpush2.msra.mxu0 0.0
  %896 = vmatprep.subr.mxu0 0.0
  %897 = vmatpush2.msra.mxu0 0.0
  %898 = vmatprep.subr.mxu0 0.0
  %899 = vmatpush2.msra.mxu0 0.0
  %900 = vmatprep.mubr.f32.mxu0 0.0
  %901 = vmatmul.mubr.f32.gmra.mxu0 %v831
  %v902 = vpop.f32.mrf.mxu0
  %v903 = vadd.f32 0.0, %v902
  %v904 = vpop.f32.mrf.mxu0
  %905 = vmatprep.mubr.f32.mxu0 0.0
  %906 = vmatmul.mubr.f32.gmra.mxu0 %v834
  %v907 = vpop.f32.mrf.mxu0
  %v908 = vadd.f32 0.0, %v907
  %v909 = vpop.f32.mrf.mxu0
  %910 = vdwg.mxu0
  %v911 = vmul.f32 %v903, %v693
  %v912 = vmul.f32 %v908, %v693
  %v913 = vadd.f32 %v828, %v911
  %v914 = vadd.f32 %v829, %v912
  %v915 = vadd.f32 %v913, %v744
  %v916 = vadd.f32 %v914, %v745
  %v917 = vld [vmem:[%s1 + $0x60] sm:$0xff]
  %v918 = vld [vmem:[%s1 + $0x68] sm:$0xff]
  %v919 = vld [vmem:[%s4 + $0x60] sm:$0xff]
  %v920 = vld [vmem:[%s4 + $0x68] sm:$0xff]
  %922 = vset.pattern.permute.xlu0 0
  %923 = vperm.xlu0 %922, %v919
  %v924 = vpop.permute.xlu0 %923
  %927 = vset.pattern.permute.xlu0 0
  %928 = vperm.xlu0 %927, %v920
  %v929 = vpop.permute.xlu0 %928
  %v932 = vsel %vm173, %v917, 0
  %v935 = vsel %vm173, %v918, 0
  %937 = vmatprep.subr.mxu0 0.0
  %938 = vmatpush1.msra.mxu0 0.0
  %939 = vmatprep.subr.mxu0 0.0
  %940 = vmatpush1.msra.mxu0 0.0
  %941 = vmatprep.subr.mxu0 0.0
  %942 = vmatpush1.msra.mxu0 0.0
  %943 = vmatprep.subr.mxu0 0.0
  %944 = vmatpush1.msra.mxu0 0.0
  %945 = vmatprep.subr.mxu0 0.0
  %946 = vmatpush1.msra.mxu0 0.0
  %947 = vmatprep.subr.mxu0 0.0
  %948 = vmatpush1.msra.mxu0 0.0
  %949 = vmatprep.subr.mxu0 0.0
  %950 = vmatpush1.msra.mxu0 0.0
  %951 = vmatprep.subr.mxu0 0.0
  %952 = vmatpush1.msra.mxu0 0.0
  %953 = vmatprep.subr.mxu0 0.0
  %954 = vmatpush1.msra.mxu0 0.0
  %955 = vmatprep.subr.mxu0 0.0
  %956 = vmatpush1.msra.mxu0 0.0
  %957 = vmatprep.subr.mxu0 0.0
  %958 = vmatpush1.msra.mxu0 0.0
  %959 = vmatprep.subr.mxu0 0.0
  %960 = vmatpush1.msra.mxu0 0.0
  %961 = vmatprep.subr.mxu0 0.0
  %962 = vmatpush1.msra.mxu0 0.0
  %963 = vmatprep.subr.mxu0 0.0
  %964 = vmatpush1.msra.mxu0 0.0
  %965 = vmatprep.subr.mxu0 0.0
  %966 = vmatpush1.msra.mxu0 %v916
  %967 = vmatprep.subr.mxu0 0.0
  %968 = vmatpush1.msra.mxu0 %v915
  %969 = vmatprep.subr.mxu0 0.0
  %970 = vmatpush2.msra.mxu0 0.0
  %971 = vmatprep.subr.mxu0 0.0
  %972 = vmatpush2.msra.mxu0 0.0
  %973 = vmatprep.subr.mxu0 0.0
  %974 = vmatpush2.msra.mxu0 0.0
  %975 = vmatprep.subr.mxu0 0.0
  %976 = vmatpush2.msra.mxu0 0.0
  %977 = vmatprep.subr.mxu0 0.0
  %978 = vmatpush2.msra.mxu0 0.0
  %979 = vmatprep.subr.mxu0 0.0
  %980 = vmatpush2.msra.mxu0 0.0
  %981 = vmatprep.subr.mxu0 0.0
  %982 = vmatpush2.msra.mxu0 0.0
  %983 = vmatprep.subr.mxu0 0.0
  %984 = vmatpush2.msra.mxu0 0.0
  %985 = vmatprep.subr.mxu0 0.0
  %986 = vmatpush2.msra.mxu0 0.0
  %987 = vmatprep.subr.mxu0 0.0
  %988 = vmatpush2.msra.mxu0 0.0
  %989 = vmatprep.subr.mxu0 0.0
  %990 = vmatpush2.msra.mxu0 0.0
  %991 = vmatprep.subr.mxu0 0.0
  %992 = vmatpush2.msra.mxu0 0.0
  %993 = vmatprep.subr.mxu0 0.0
  %994 = vmatpush2.msra.mxu0 0.0
  %995 = vmatprep.subr.mxu0 0.0
  %996 = vmatpush2.msra.mxu0 0.0
  %997 = vmatprep.subr.mxu0 0.0
  %998 = vmatpush2.msra.mxu0 0.0
  %999 = vmatprep.subr.mxu0 0.0
  %1000 = vmatpush2.msra.mxu0 0.0
  %1001 = vmatprep.mubr.f32.mxu0 0.0
  %1002 = vmatmul.mubr.f32.gmra.mxu0 %v932
  %v1003 = vpop.f32.mrf.mxu0
  %v1004 = vadd.f32 %v924, %v1003
  %v1005 = vpop.f32.mrf.mxu0
  %1006 = vmatprep.mubr.f32.mxu0 0.0
  %1007 = vmatmul.mubr.f32.gmra.mxu0 %v935
  %v1008 = vpop.f32.mrf.mxu0
  %v1009 = vadd.f32 %v929, %v1008
  %v1010 = vpop.f32.mrf.mxu0
  %1011 = vdwg.mxu0
  %v1012 = vld [vmem:[%s4 + $0x70] sm:$0xff]
  %v1013 = vld [vmem:[%s4 + $0x78] sm:$0xff]
  %1015 = vset.pattern.permute.xlu0 0
  %1016 = vperm.xlu0 %1015, %v1012
  %v1017 = vpop.permute.xlu0 %1016
  %1020 = vset.pattern.permute.xlu0 0
  %1021 = vperm.xlu0 %1020, %v1013
  %v1022 = vpop.permute.xlu0 %1021
  %v1024 = vmul.f32 %v317, %v1017
  %v1025 = vmul.f32 %v322, %v1022
  %v1026 = vadd.f32 %v1004, %v1024
  %v1027 = vadd.f32 %v1009, %v1025
  %v1028 = vld [vmem:[%s4 + $0x80] sm:$0xff]
  %v1029 = vld [vmem:[%s4 + $0x88] sm:$0xff]
  %1031 = vset.pattern.permute.xlu0 0
  %1032 = vperm.xlu0 %1031, %v1028
  %v1033 = vpop.permute.xlu0 %1032
  %1036 = vset.pattern.permute.xlu0 0
  %1037 = vperm.xlu0 %1036, %v1029
  %v1038 = vpop.permute.xlu0 %1037
  %v1040 = vadd.f32 %v1026, %v1033
  %v1041 = vadd.f32 %v1027, %v1038
  %v1042 = vadd.f32 %v1040, %v1041
  %v1043 = vrot.slane %v1042, 4
  %v1044 = vadd.f32 %v1042, %v1043
  %v1045 = vrot.slane %v1044, 2
  %v1046 = vadd.f32 %v1044, %v1045
  %v1047 = vrot.slane %v1046, 1
  %v1048 = vadd.f32 %v1046, %v1047
  %v1049 = vmul.f32 %v1040, %v1040
  %v1050 = vmul.f32 %v1041, %v1041
  %v1051 = vadd.f32 %v1049, %v1050
  %v1052 = vrot.slane %v1051, 4
  %v1053 = vadd.f32 %v1051, %v1052
  %v1054 = vrot.slane %v1053, 2
  %v1055 = vadd.f32 %v1053, %v1054
  %v1056 = vrot.slane %v1055, 1
  %v1057 = vadd.f32 %v1055, %v1056
  %v1058 = vmul.f32 %v1048, %v20
  %v1059 = vsel %vm41, %v1058, 0.0
  %1060 = vadd.xlane.f32.xlu0 %v1059
  %v1061 = vpop.xlane.xlu0 %1060
  %v1062 = vmul.f32 %v1048, %v21
  %v1063 = vsel %vm41, %v1062, 0.0
  %1064 = vadd.xlane.f32.xlu0 %v1063
  %v1065 = vpop.xlane.xlu0 %1064
  %v1066 = vmul.f32 %v1057, %v20
  %v1067 = vsel %vm41, %v1066, 0.0
  %1068 = vadd.xlane.f32.xlu0 %v1067
  %v1069 = vpop.xlane.xlu0 %1068
  %v1070 = vmul.f32 %v1057, %v21
  %v1071 = vsel %vm41, %v1070, 0.0
  %1072 = vadd.xlane.f32.xlu0 %v1071
  %v1073 = vpop.xlane.xlu0 %1072
  %v1074 = vmul.f32 %v1061, %v20
  %v1075 = vmul.f32 %v1065, %v21
  %v1076 = vadd.f32 %v1074, %v1075
  %v1077 = vmul.f32 %v1076, 0.0009765625
  %v1078 = vmul.f32 %v1069, %v20
  %v1079 = vmul.f32 %v1073, %v21
  %v1080 = vadd.f32 %v1078, %v1079
  %v1081 = vmul.f32 %v1080, 0.0009765625
  %v1082 = vmul.f32 %v1077, %v1077
  %v1083 = vsub.f32 %v1081, %v1082
  %v1084 = vlaneseq
  %v1085 = vshrl.u32 %v1084, 7
  %v1086 = vsub.s32 0, %v1085
  %v1087 = vrot.slane %v1077, %v1086
  %v1088 = vsub.f32 %v1040, %v1087
  %v1089 = vsub.f32 %v1041, %v1087
  %v1090 = vadd.f32 %v1083, 1e-05
  %v1091 = vrsqrt.pop %v1090
  %v1092 = vlaneseq
  %v1093 = vshrl.u32 %v1092, 7
  %v1094 = vsub.s32 0, %v1093
  %v1095 = vrot.slane %v1091, %v1094
  %v1096 = vmul.f32 %v1088, %v1095
  %v1097 = vmul.f32 %v1089, %v1095
  %v1098 = vadd.f32 %v22, %v1096
  %v1099 = vadd.f32 %v23, %v1097
  %v1100 = vadd.f32 %v1098, %v1099
  %v1101 = vrot.slane %v1100, 4
  %v1102 = vadd.f32 %v1100, %v1101
  %v1103 = vrot.slane %v1102, 2
  %v1104 = vadd.f32 %v1102, %v1103
  %v1105 = vrot.slane %v1104, 1
  %v1106 = vadd.f32 %v1104, %v1105
  %v1107 = vmul.f32 %v1098, %v1098
  %v1108 = vmul.f32 %v1099, %v1099
  %v1109 = vadd.f32 %v1107, %v1108
  %v1110 = vrot.slane %v1109, 4
  %v1111 = vadd.f32 %v1109, %v1110
  %v1112 = vrot.slane %v1111, 2
  %v1113 = vadd.f32 %v1111, %v1112
  %v1114 = vrot.slane %v1113, 1
  %v1115 = vadd.f32 %v1113, %v1114
  %v1116 = vmul.f32 %v1106, %v20
  %v1117 = vsel %vm41, %v1116, 0.0
  %1118 = vadd.xlane.f32.xlu0 %v1117
  %v1119 = vpop.xlane.xlu0 %1118
  %v1120 = vmul.f32 %v1106, %v21
  %v1121 = vsel %vm41, %v1120, 0.0
  %1122 = vadd.xlane.f32.xlu0 %v1121
  %v1123 = vpop.xlane.xlu0 %1122
  %v1124 = vmul.f32 %v1115, %v20
  %v1125 = vsel %vm41, %v1124, 0.0
  %1126 = vadd.xlane.f32.xlu0 %v1125
  %v1127 = vpop.xlane.xlu0 %1126
  %v1128 = vmul.f32 %v1115, %v21
  %v1129 = vsel %vm41, %v1128, 0.0
  %1130 = vadd.xlane.f32.xlu0 %v1129
  %v1131 = vpop.xlane.xlu0 %1130
  %v1132 = vmul.f32 %v1119, %v20
  %v1133 = vmul.f32 %v1123, %v21
  %v1134 = vadd.f32 %v1132, %v1133
  %v1135 = vmul.f32 %v1134, 0.0009765625
  %v1136 = vmul.f32 %v1127, %v20
  %v1137 = vmul.f32 %v1131, %v21
  %v1138 = vadd.f32 %v1136, %v1137
  %v1139 = vmul.f32 %v1138, 0.0009765625
  %v1140 = vmul.f32 %v1135, %v1135
  %v1141 = vsub.f32 %v1139, %v1140
  %v1142 = vlaneseq
  %v1143 = vshrl.u32 %v1142, 7
  %v1144 = vsub.s32 0, %v1143
  %v1145 = vrot.slane %v1135, %v1144
  %v1146 = vsub.f32 %v1098, %v1145
  %v1147 = vsub.f32 %v1099, %v1145
  %v1148 = vadd.f32 %v1141, 1e-05
  %v1149 = vrsqrt.pop %v1148
  %v1150 = vlaneseq
  %v1151 = vshrl.u32 %v1150, 7
  %v1152 = vsub.s32 0, %v1151
  %v1153 = vrot.slane %v1149, %v1152
  %v1154 = vmul.f32 %v1146, %v1153
  %v1155 = vmul.f32 %v1147, %v1153
  %v1156 = vld [vmem:[%s3 + $0x20] sm:$0xff]
  %v1157 = vld [vmem:[%s3 + $0x28] sm:$0xff]
  %v1158 = vmul.f32 %v1154, %v1156
  %v1159 = vmul.f32 %v1155, %v1157
  %v1160 = vld [vmem:[%s3 + $0x30] sm:$0xff]
  %v1161 = vld [vmem:[%s3 + $0x38] sm:$0xff]
  %v1162 = vadd.f32 %v1158, %v1160
  %v1163 = vadd.f32 %v1159, %v1161
  %v1164 = vld [vmem:[%s1 + $0x70] sm:$0xff]
  %v1165 = vld [vmem:[%s1 + $0x78] sm:$0xff]
  %v1166 = vld [vmem:[%s1 + $0x80] sm:$0xff]
  %v1167 = vld [vmem:[%s1 + $0x88] sm:$0xff]
  %v1168 = vld [vmem:[%s4 + $0xb0] sm:$0xff]
  %v1169 = vld [vmem:[%s4 + $0xb8] sm:$0xff]
  %v1170 = vld [vmem:[%s4 + $0xc0] sm:$0xff]
  %v1171 = vld [vmem:[%s4 + $0xc8] sm:$0xff]
  %1173 = vset.pattern.permute.xlu0 0
  %1174 = vperm.xlu0 %1173, %v1168
  %v1175 = vpop.permute.xlu0 %1174
  %1178 = vset.pattern.permute.xlu0 0
  %1179 = vperm.xlu0 %1178, %v1169
  %v1180 = vpop.permute.xlu0 %1179
  %1183 = vset.pattern.permute.xlu0 0
  %1184 = vperm.xlu0 %1183, %v1170
  %v1185 = vpop.permute.xlu0 %1184
  %1188 = vset.pattern.permute.xlu0 0
  %1189 = vperm.xlu0 %1188, %v1171
  %v1190 = vpop.permute.xlu0 %1189
  %v1193 = vsel %vm173, %v1164, 0
  %v1196 = vsel %vm173, %v1165, 0
  %v1199 = vsel %vm173, %v1166, 0
  %v1202 = vsel %vm173, %v1167, 0
  %1204 = vmatprep.subr.mxu0 0.0
  %1205 = vmatpush1.msra.mxu0 0.0
  %1206 = vmatprep.subr.mxu0 0.0
  %1207 = vmatpush1.msra.mxu0 0.0
  %1208 = vmatprep.subr.mxu0 0.0
  %1209 = vmatpush1.msra.mxu0 0.0
  %1210 = vmatprep.subr.mxu0 0.0
  %1211 = vmatpush1.msra.mxu0 0.0
  %1212 = vmatprep.subr.mxu0 0.0
  %1213 = vmatpush1.msra.mxu0 0.0
  %1214 = vmatprep.subr.mxu0 0.0
  %1215 = vmatpush1.msra.mxu0 0.0
  %1216 = vmatprep.subr.mxu0 0.0
  %1217 = vmatpush1.msra.mxu0 0.0
  %1218 = vmatprep.subr.mxu0 0.0
  %1219 = vmatpush1.msra.mxu0 0.0
  %1220 = vmatprep.subr.mxu0 0.0
  %1221 = vmatpush1.msra.mxu0 0.0
  %1222 = vmatprep.subr.mxu0 0.0
  %1223 = vmatpush1.msra.mxu0 0.0
  %1224 = vmatprep.subr.mxu0 0.0
  %1225 = vmatpush1.msra.mxu0 0.0
  %1226 = vmatprep.subr.mxu0 0.0
  %1227 = vmatpush1.msra.mxu0 0.0
  %1228 = vmatprep.subr.mxu0 0.0
  %1229 = vmatpush1.msra.mxu0 0.0
  %1230 = vmatprep.subr.mxu0 0.0
  %1231 = vmatpush1.msra.mxu0 0.0
  %1232 = vmatprep.subr.mxu0 0.0
  %1233 = vmatpush1.msra.mxu0 %v1163
  %1234 = vmatprep.subr.mxu0 0.0
  %1235 = vmatpush1.msra.mxu0 %v1162
  %1236 = vmatprep.subr.mxu0 0.0
  %1237 = vmatpush2.msra.mxu0 0.0
  %1238 = vmatprep.subr.mxu0 0.0
  %1239 = vmatpush2.msra.mxu0 0.0
  %1240 = vmatprep.subr.mxu0 0.0
  %1241 = vmatpush2.msra.mxu0 0.0
  %1242 = vmatprep.subr.mxu0 0.0
  %1243 = vmatpush2.msra.mxu0 0.0
  %1244 = vmatprep.subr.mxu0 0.0
  %1245 = vmatpush2.msra.mxu0 0.0
  %1246 = vmatprep.subr.mxu0 0.0
  %1247 = vmatpush2.msra.mxu0 0.0
  %1248 = vmatprep.subr.mxu0 0.0
  %1249 = vmatpush2.msra.mxu0 0.0
  %1250 = vmatprep.subr.mxu0 0.0
  %1251 = vmatpush2.msra.mxu0 0.0
  %1252 = vmatprep.subr.mxu0 0.0
  %1253 = vmatpush2.msra.mxu0 0.0
  %1254 = vmatprep.subr.mxu0 0.0
  %1255 = vmatpush2.msra.mxu0 0.0
  %1256 = vmatprep.subr.mxu0 0.0
  %1257 = vmatpush2.msra.mxu0 0.0
  %1258 = vmatprep.subr.mxu0 0.0
  %1259 = vmatpush2.msra.mxu0 0.0
  %1260 = vmatprep.subr.mxu0 0.0
  %1261 = vmatpush2.msra.mxu0 0.0
  %1262 = vmatprep.subr.mxu0 0.0
  %1263 = vmatpush2.msra.mxu0 0.0
  %1264 = vmatprep.subr.mxu0 0.0
  %1265 = vmatpush2.msra.mxu0 0.0
  %1266 = vmatprep.subr.mxu0 0.0
  %1267 = vmatpush2.msra.mxu0 0.0
  %1268 = vmatprep.mubr.f32.mxu0 0.0
  %1269 = vmatmul.mubr.f32.gmra.mxu0 %v1193
  %v1270 = vpop.f32.mrf.mxu0
  %v1271 = vadd.f32 %v1175, %v1270
  %v1272 = vpop.f32.mrf.mxu0
  %1273 = vmatprep.mubr.f32.mxu0 0.0
  %1274 = vmatmul.mubr.f32.gmra.mxu0 %v1196
  %v1275 = vpop.f32.mrf.mxu0
  %v1276 = vadd.f32 %v1180, %v1275
  %v1277 = vpop.f32.mrf.mxu0
  %1278 = vmatprep.mubr.f32.mxu0 0.0
  %1279 = vmatmul.mubr.f32.gmra.mxu0 %v1199
  %v1280 = vpop.f32.mrf.mxu0
  %v1281 = vadd.f32 %v1185, %v1280
  %v1282 = vpop.f32.mrf.mxu0
  %1283 = vmatprep.mubr.f32.mxu0 0.0
  %1284 = vmatmul.mubr.f32.gmra.mxu0 %v1202
  %v1285 = vpop.f32.mrf.mxu0
  %v1286 = vadd.f32 %v1190, %v1285
  %v1287 = vpop.f32.mrf.mxu0
  %1288 = vdwg.mxu0
  %v1289 = vmul.f32 %v1271, 0.5
  %v1290 = vmul.f32 %v1276, 0.5
  %v1291 = vmul.f32 %v1281, 0.5
  %v1292 = vmul.f32 %v1286, 0.5
  %v1293 = vmul.f32 %v1271, 0.70710677
  %v1294 = vmul.f32 %v1276, 0.70710677
  %v1295 = vmul.f32 %v1281, 0.70710677
  %v1296 = vmul.f32 %v1286, 0.70710677
  %vm1297 = vcmp.ge.f32.partialorder %v1293, 0.0
  %vm1298 = vcmp.ge.f32.partialorder %v1294, 0.0
  %vm1299 = vcmp.ge.f32.partialorder %v1295, 0.0
  %vm1300 = vcmp.ge.f32.partialorder %v1296, 0.0
  %v1301 = vsel %vm1297, 1.0, -1.0
  %v1302 = vsel %vm1298, 1.0, -1.0
  %v1303 = vsel %vm1299, 1.0, -1.0
  %v1304 = vsel %vm1300, 1.0, -1.0
  %v1305 = vand.u32 2147483647, %v1293
  %v1306 = vand.u32 2147483647, %v1294
  %v1307 = vand.u32 2147483647, %v1295
  %v1308 = vand.u32 2147483647, %v1296
  %v1309 = vmul.f32 %v1305, 0.3275911
  %v1310 = vmul.f32 %v1306, 0.3275911
  %v1311 = vmul.f32 %v1307, 0.3275911
  %v1312 = vmul.f32 %v1308, 0.3275911
  %v1313 = vadd.f32 %v1309, 1.0
  %v1314 = vadd.f32 %v1310, 1.0
  %v1315 = vadd.f32 %v1311, 1.0
  %v1316 = vadd.f32 %v1312, 1.0
  %v1317 = vrcp.pop %v1313
  %v1318 = vmul.f32 1.0, %v1317
  %v1319 = vrcp.pop %v1314
  %v1320 = vmul.f32 1.0, %v1319
  %v1321 = vrcp.pop %v1315
  %v1322 = vmul.f32 1.0, %v1321
  %v1323 = vrcp.pop %v1316
  %v1324 = vmul.f32 1.0, %v1323
  %v1325 = vmul.f32 %v1318, 1.0614054
  %v1326 = vmul.f32 %v1320, 1.0614054
  %v1327 = vmul.f32 %v1322, 1.0614054
  %v1328 = vmul.f32 %v1324, 1.0614054
  %v1329 = vadd.f32 %v1325, -1.4531521
  %v1330 = vadd.f32 %v1326, -1.4531521
  %v1331 = vadd.f32 %v1327, -1.4531521
  %v1332 = vadd.f32 %v1328, -1.4531521
  %v1333 = vmul.f32 %v1329, %v1318
  %v1334 = vmul.f32 %v1330, %v1320
  %v1335 = vmul.f32 %v1331, %v1322
  %v1336 = vmul.f32 %v1332, %v1324
  %v1337 = vadd.f32 %v1333, 1.4214138
  %v1338 = vadd.f32 %v1334, 1.4214138
  %v1339 = vadd.f32 %v1335, 1.4214138
  %v1340 = vadd.f32 %v1336, 1.4214138
  %v1341 = vmul.f32 %v1337, %v1318
  %v1342 = vmul.f32 %v1338, %v1320
  %v1343 = vmul.f32 %v1339, %v1322
  %v1344 = vmul.f32 %v1340, %v1324
  %v1345 = vadd.f32 %v1341, -0.28449672
  %v1346 = vadd.f32 %v1342, -0.28449672
  %v1347 = vadd.f32 %v1343, -0.28449672
  %v1348 = vadd.f32 %v1344, -0.28449672
  %v1349 = vmul.f32 %v1345, %v1318
  %v1350 = vmul.f32 %v1346, %v1320
  %v1351 = vmul.f32 %v1347, %v1322
  %v1352 = vmul.f32 %v1348, %v1324
  %v1353 = vadd.f32 %v1349, 0.2548296
  %v1354 = vadd.f32 %v1350, 0.2548296
  %v1355 = vadd.f32 %v1351, 0.2548296
  %v1356 = vadd.f32 %v1352, 0.2548296
  %v1357 = vmul.f32 %v1353, %v1318
  %v1358 = vmul.f32 %v1354, %v1320
  %v1359 = vmul.f32 %v1355, %v1322
  %v1360 = vmul.f32 %v1356, %v1324
  %v1361 = vsub.f32 0.0, %v1305
  %v1362 = vsub.f32 0.0, %v1306
  %v1363 = vsub.f32 0.0, %v1307
  %v1364 = vsub.f32 0.0, %v1308
  %v1365 = vmul.f32 %v1361, %v1305
  %v1366 = vmul.f32 %v1362, %v1306
  %v1367 = vmul.f32 %v1363, %v1307
  %v1368 = vmul.f32 %v1364, %v1308
  %v1369 = vmul.f32 %v1365, 1.442695
  %v1370 = vpow.pop %v1369
  %v1371 = vmul.f32 %v1366, 1.442695
  %v1372 = vpow.pop %v1371
  %v1373 = vmul.f32 %v1367, 1.442695
  %v1374 = vpow.pop %v1373
  %v1375 = vmul.f32 %v1368, 1.442695
  %v1376 = vpow.pop %v1375
  %v1377 = vmul.f32 %v1357, %v1370
  %v1378 = vmul.f32 %v1358, %v1372
  %v1379 = vmul.f32 %v1359, %v1374
  %v1380 = vmul.f32 %v1360, %v1376
  %v1381 = vsub.f32 1.0, %v1377
  %v1382 = vsub.f32 1.0, %v1378
  %v1383 = vsub.f32 1.0, %v1379
  %v1384 = vsub.f32 1.0, %v1380
  %v1385 = vmul.f32 %v1301, %v1381
  %v1386 = vmul.f32 %v1302, %v1382
  %v1387 = vmul.f32 %v1303, %v1383
  %v1388 = vmul.f32 %v1304, %v1384
  %v1389 = vadd.f32 %v1385, 1.0
  %v1390 = vadd.f32 %v1386, 1.0
  %v1391 = vadd.f32 %v1387, 1.0
  %v1392 = vadd.f32 %v1388, 1.0
  %v1393 = vmul.f32 %v1289, %v1389
  %v1394 = vmul.f32 %v1290, %v1390
  %v1395 = vmul.f32 %v1291, %v1391
  %v1396 = vmul.f32 %v1292, %v1392
  %v1397 = vld [vmem:[%s2] sm:$0xff]
  %v1398 = vld [vmem:[%s2 + $0x8] sm:$0xff]
  %v1399 = vld [vmem:[%s4 + $0xd0] sm:$0xff]
  %v1400 = vld [vmem:[%s4 + $0xd8] sm:$0xff]
  %1402 = vset.pattern.permute.xlu0 0
  %1403 = vperm.xlu0 %1402, %v1399
  %v1404 = vpop.permute.xlu0 %1403
  %1407 = vset.pattern.permute.xlu0 0
  %1408 = vperm.xlu0 %1407, %v1400
  %v1409 = vpop.permute.xlu0 %1408
  %v1412 = vsel %vm746, %v1397, 0
  %v1415 = vsel %vm746, %v1398, 0
  %1417 = vmatprep.subr.mxu0 0.0
  %1418 = vmatpush1.msra.mxu0 0.0
  %1419 = vmatprep.subr.mxu0 0.0
  %1420 = vmatpush1.msra.mxu0 0.0
  %1421 = vmatprep.subr.mxu0 0.0
  %1422 = vmatpush1.msra.mxu0 0.0
  %1423 = vmatprep.subr.mxu0 0.0
  %1424 = vmatpush1.msra.mxu0 0.0
  %1425 = vmatprep.subr.mxu0 0.0
  %1426 = vmatpush1.msra.mxu0 0.0
  %1427 = vmatprep.subr.mxu0 0.0
  %1428 = vmatpush1.msra.mxu0 0.0
  %1429 = vmatprep.subr.mxu0 0.0
  %1430 = vmatpush1.msra.mxu0 0.0
  %1431 = vmatprep.subr.mxu0 0.0
  %1432 = vmatpush1.msra.mxu0 0.0
  %1433 = vmatprep.subr.mxu0 0.0
  %1434 = vmatpush1.msra.mxu0 0.0
  %1435 = vmatprep.subr.mxu0 0.0
  %1436 = vmatpush1.msra.mxu0 0.0
  %1437 = vmatprep.subr.mxu0 0.0
  %1438 = vmatpush1.msra.mxu0 0.0
  %1439 = vmatprep.subr.mxu0 0.0
  %1440 = vmatpush1.msra.mxu0 0.0
  %1441 = vmatprep.subr.mxu0 0.0
  %1442 = vmatpush1.msra.mxu0 %v1396
  %1443 = vmatprep.subr.mxu0 0.0
  %1444 = vmatpush1.msra.mxu0 %v1395
  %1445 = vmatprep.subr.mxu0 0.0
  %1446 = vmatpush1.msra.mxu0 %v1394
  %1447 = vmatprep.subr.mxu0 0.0
  %1448 = vmatpush1.msra.mxu0 %v1393
  %1449 = vmatprep.subr.mxu0 0.0
  %1450 = vmatpush2.msra.mxu0 0.0
  %1451 = vmatprep.subr.mxu0 0.0
  %1452 = vmatpush2.msra.mxu0 0.0
  %1453 = vmatprep.subr.mxu0 0.0
  %1454 = vmatpush2.msra.mxu0 0.0
  %1455 = vmatprep.subr.mxu0 0.0
  %1456 = vmatpush2.msra.mxu0 0.0
  %1457 = vmatprep.subr.mxu0 0.0
  %1458 = vmatpush2.msra.mxu0 0.0
  %1459 = vmatprep.subr.mxu0 0.0
  %1460 = vmatpush2.msra.mxu0 0.0
  %1461 = vmatprep.subr.mxu0 0.0
  %1462 = vmatpush2.msra.mxu0 0.0
  %1463 = vmatprep.subr.mxu0 0.0
  %1464 = vmatpush2.msra.mxu0 0.0
  %1465 = vmatprep.subr.mxu0 0.0
  %1466 = vmatpush2.msra.mxu0 0.0
  %1467 = vmatprep.subr.mxu0 0.0
  %1468 = vmatpush2.msra.mxu0 0.0
  %1469 = vmatprep.subr.mxu0 0.0
  %1470 = vmatpush2.msra.mxu0 0.0
  %1471 = vmatprep.subr.mxu0 0.0
  %1472 = vmatpush2.msra.mxu0 0.0
  %1473 = vmatprep.subr.mxu0 0.0
  %1474 = vmatpush2.msra.mxu0 0.0
  %1475 = vmatprep.subr.mxu0 0.0
  %1476 = vmatpush2.msra.mxu0 0.0
  %1477 = vmatprep.subr.mxu0 0.0
  %1478 = vmatpush2.msra.mxu0 0.0
  %1479 = vmatprep.subr.mxu0 0.0
  %1480 = vmatpush2.msra.mxu0 0.0
  %1481 = vmatprep.mubr.f32.mxu0 0.0
  %1482 = vmatmul.mubr.f32.gmra.mxu0 %v1412
  %v1483 = vpop.f32.mrf.mxu0
  %v1484 = vadd.f32 %v1404, %v1483
  %v1485 = vpop.f32.mrf.mxu0
  %1486 = vmatprep.mubr.f32.mxu0 0.0
  %1487 = vmatmul.mubr.f32.gmra.mxu0 %v1415
  %v1488 = vpop.f32.mrf.mxu0
  %v1489 = vadd.f32 %v1409, %v1488
  %v1490 = vpop.f32.mrf.mxu0
  %1491 = vdwg.mxu0
  %v1492 = vadd.f32 %v1162, %v1484
  %v1493 = vadd.f32 %v1163, %v1489
  %1494 = vst [vmem:[%s5] sm:$0xff] %v1492
  %1495 = vst [vmem:[%s5 + $0x8] sm:$0xff] %v1493
  // Predicated region
  $region22: #{fc_transformer_block.1} parent=0 // pred_check
    _
  $region23: #{fc_transformer_block.1} parent=0 // pred_check_branch
    %1497 = sbr.rel (0) target = $region25
  $region24: #{fc_transformer_block.1} parent=0 // pred_region
    _
  $region25: #{fc_transformer_block.1} parent=0 // pred_fallthru
    _
  // Predicated region
  $region26: #{fc_transformer_block.1} parent=0 // pred_check
    _
  $region27: #{fc_transformer_block.1} parent=0 // pred_check_branch
    %1499 = sbr.rel (0) target = $region29
  $region28: #{fc_transformer_block.1} parent=0 // pred_region
    _
  $region29: #{fc_transformer_block.1} parent=0 // pred_fallthru
    _

</llo_original>
